<compile_context>
chip_gen: v7x
topology: tpu7x:2x2x1
jax: 0.10.0
libtpu: 0.0.40
codegen_flags: <defaults>
</compile_context>

<pallas_src>
import functools

import jax
import jax.numpy as jnp
from jax import lax
from jax.experimental import pallas as pl
from jax.experimental.pallas import tpu as pltpu


def _spectral_sigma(weight, ln_lambda, iters=100):
    """max(1, sigma_max(weight.reshape(Cout, -1)) / ln_lambda) via power iteration.

    # TODO(synk): the PyTorch module uses exact torch.svd; power iteration
    # (iters=100 is far past convergence for these tiny matrices) gives the
    # same top singular value and avoids a serial, MXU-unfriendly SVD.
    """
    cout = weight.shape[0]
    w_mat = weight.reshape(cout, -1).astype(jnp.float32)
    u = jax.random.normal(jax.random.PRNGKey(1), (cout,), jnp.float32)
    u = u / jnp.linalg.norm(u)

    def body(_, u):
        v = w_mat.T @ u
        v = v / (jnp.linalg.norm(v) + 1e-12)
        u = w_mat @ v
        return u / (jnp.linalg.norm(u) + 1e-12)

    u = lax.fori_loop(0, iters, body, u)
    sigma = jnp.linalg.norm(w_mat.T @ u)
    return jnp.maximum(jnp.float32(1.0), sigma / jnp.float32(ln_lambda))


def _choose_tile_h(H, W, Cin, Cout, pad, batch, bytes_budget=16 * 1024 * 1024):
    """Row-tile TH with TH | H, TH*W % 128 == 0 (lane-dense, unmasked output
    stores) and double-buffered tiles inside a VMEM budget.

    Prefer the LARGEST such tile (fewest grid steps, smallest halo overhead);
    only when batch == 1 do we trade tile size for H/TH >= 2 so the spatial
    grid axis can load-balance v7x's two TensorCores."""
    candidates = []
    for th in range(H, 0, -1):
        if H % th or (th * W) % 128:
            continue
        in_bytes = Cin * (th + 2 * pad) * (W + 2 * pad) * 2    # bf16 halo tile
        out_bytes = Cout * th * W * 4                          # f32 output tile
        if 2 * (in_bytes + out_bytes) > bytes_budget:          # double-buffered
            continue
        candidates.append(th)                                  # descending th
    if not candidates:
        return H
    if batch >= 2:
        return candidates[0]
    for th in candidates:                                      # batch == 1
        if H // th >= 2:
            return th
    return candidates[0]


def _sn_conv_kernel(inv_sigma_ref, x_ref, w_ref, b_ref, o_ref, *, K, TH, W):
    # inv_sigma_ref: (1, 1) f32 in SMEM                  -> scalar 1/sigma
    # x_ref: (1, 1, Cin, TH+2p, W+2p) bf16 halo'd input row-tile (VMEM)
    # w_ref: (K*K, Cout, Cin) bf16 conv weight, tap-major (VMEM, resident)
    # b_ref: (Cout, 1) f32 bias (VMEM)
    # o_ref: (1, Cout, TH*W) f32 output tile (lane-dense, 128-multiple)
    inv_sigma = inv_sigma_ref[0, 0]
    xt = x_ref[0, 0]                                    # (Cin, TH+2p, W+2p)
    cin = xt.shape[0]
    cout = o_ref.shape[1]
    acc = jnp.zeros((cout, TH * W), jnp.float32)
    for kh in range(K):                                 # K*K shifted MXU matmuls
        xrow = xt[:, kh:kh + TH, :]                     # (Cin, TH, W+2p)
        for kw in range(K):
            xv = xrow[:, :, kw:kw + W].reshape(cin, TH * W)
            acc = acc + jnp.dot(w_ref[kh * K + kw], xv,
                                preferred_element_type=jnp.float32)
    # Scale + bias applied exactly once per output tile (fused epilogue).
    o_ref[0] = (acc * inv_sigma + b_ref[...]).astype(o_ref.dtype)


def spectral_norm_conv2d(x, weight, bias, ln_lambda=1.0):
    """x: (N, Cin, H, W) f32; weight: (Cout, Cin, K, K) f32; bias: (Cout,)."""
    N, Cin, H, W = x.shape
    Cout, _, K, _ = weight.shape
    # TODO(synk): stride=1 / odd-K only (matches Conv2d(padding=K//2)); even K
    # or stride != 1 would need different halo/index handling.
    pad = K // 2

    sigma = _spectral_sigma(weight, ln_lambda)
    inv_sigma = (1.0 / sigma).reshape(1, 1).astype(jnp.float32)

    TH = _choose_tile_h(H, W, Cin, Cout, pad, N)
    nH = H // TH
    THp, Wp = TH + 2 * pad, W + 2 * pad

    # Halo'd row tiles in bf16: HBM overhead is (TH+2p)/TH (1x when nH == 1),
    # not the K^2 of im2col.
    xb = x.astype(jnp.bfloat16)
    xp = jnp.pad(xb, ((0, 0), (0, 0), (pad, pad), (pad, pad)))
    x_tiles = jnp.stack(
        [xp[:, :, j * TH:j * TH + THp, :] for j in range(nH)], axis=1)
    # x_tiles: (N, nH, Cin, THp, Wp)

    # Weight, tap-major: w_kk[kh*K+kw, o, c] == weight[o, c, kh, kw]
    w_kk = jnp.transpose(weight, (2, 3, 0, 1)).reshape(K * K, Cout, Cin)
    w_kk = w_kk.astype(jnp.bfloat16)
    b2d = bias.reshape(Cout, 1).astype(jnp.float32)

    # Explicit VMEM budget (double-buffered in/out tiles + resident weight),
    # capped so it also fits v7x's 64 MiB physical VMEM with headroom.
    in_tile_bytes = Cin * THp * Wp * 2
    out_tile_bytes = Cout * TH * W * 4
    w_bytes = K * K * Cout * Cin * 2
    vmem_limit = int(min(48 * 1024 * 1024,
                         max(16 * 1024 * 1024,
                             4 * (in_tile_bytes + out_tile_bytes) + w_bytes)))

    cost = pl.CostEstimate(
        flops=2 * N * Cout * Cin * K * K * H * W,
        transcendentals=0,
        bytes_accessed=(N * nH * Cin * THp * Wp * 2      # halo'd input tiles
                        + K * K * Cout * Cin * 2          # weight
                        + Cout * 4                        # bias
                        + N * Cout * H * W * 4))          # output

    kernel = functools.partial(_sn_conv_kernel, K=K, TH=TH, W=W)
    out_flat = pl.pallas_call(
        kernel,
        out_shape=jax.ShapeDtypeStruct((N, Cout, H * W), jnp.float32),
        grid=(N, nH),
        in_specs=[
            pl.BlockSpec(memory_space=pltpu.MemorySpace.SMEM),          # 1/sigma
            pl.BlockSpec((1, 1, Cin, THp, Wp),
                         lambda n, j: (n, j, 0, 0, 0)),                 # x tiles
            pl.BlockSpec((K * K, Cout, Cin), lambda n, j: (0, 0, 0)),   # weight
            pl.BlockSpec((Cout, 1), lambda n, j: (0, 0)),               # bias
        ],
        out_specs=pl.BlockSpec((1, Cout, TH * W), lambda n, j: (n, 0, j)),
        compiler_params=pltpu.CompilerParams(
            dimension_semantics=("parallel", "parallel"),
            vmem_limit_bytes=vmem_limit),
        cost_estimate=cost,
    )(inv_sigma, x_tiles, w_kk, b2d)

    return out_flat.reshape(N, Cout, H, W)


if __name__ == "__main__":
    # Deterministic synthetic parameters (module __init__: wrapped Conv2d).
    N, Cin, H, W = 2, 4, 16, 16
    Cout, K = 8, 3
    key = jax.random.PRNGKey(0)
    kx, kw, kb = jax.random.split(key, 3)
    x = jax.random.normal(kx, (N, Cin, H, W), dtype=jnp.float32)
    weight = 0.5 * jax.random.normal(kw, (Cout, Cin, K, K), dtype=jnp.float32)
    bias = 0.1 * jax.random.normal(kb, (Cout,), dtype=jnp.float32)

    y = spectral_norm_conv2d(x, weight, bias, ln_lambda=1.0)
    y = jax.block_until_ready(y)
    assert y.shape == (N, Cout, H, W)

    # Check 1: isolate the Pallas conv path (same sigma as the kernel used).
    sigma_pi = _spectral_sigma(weight, 1.0)
    y_ref = lax.conv_general_dilated(
        x, weight / sigma_pi, window_strides=(1, 1), padding="SAME",
        dimension_numbers=("NCHW", "OIHW", "NCHW")) + bias[None, :, None, None]
    assert jnp.allclose(y, y_ref, atol=5e-2, rtol=5e-2)

    # Check 2: full module semantics with the exact-SVD sigma (torch.svd path).
    sv = jnp.linalg.svd(weight.reshape(Cout, -1), compute_uv=False)
    sigma_svd = jnp.maximum(1.0, sv[0] / 1.0)
    y_svd = lax.conv_general_dilated(
        x, weight / sigma_svd, window_strides=(1, 1), padding="SAME",
        dimension_numbers=("NCHW", "OIHW", "NCHW")) + bias[None, :, None, None]
    assert jnp.allclose(y, y_svd, atol=5e-2, rtol=5e-2)

    print("KERNEL_OK")
</pallas_src>

<mosaic_0001>
module attributes {stable_mosaic.version = 11 : i64} {
  func.func @_sn_conv_kernel(%arg0: i32, %arg1: i32, %arg2: memref<1x1xf32, #tpu.memory_space<smem>>, %arg3: memref<1x1x4x18x18xbf16, #tpu.memory_space<vmem>>, %arg4: memref<9x8x4xbf16, #tpu.memory_space<vmem>>, %arg5: memref<8x1xf32, #tpu.memory_space<vmem>>, %arg6: memref<1x8x256xf32, #tpu.memory_space<vmem>>) attributes {dimension_semantics = [#tpu.dimension_semantics<parallel>, #tpu.dimension_semantics<parallel>], iteration_bounds = array<i64: 2, 1>, scalar_prefetch = 0 : i64, scratch_operands = 0 : i64, tpu.core_type = #tpu.core_type<tc>, window_params = [{transform_indices = @transform_0, window_bounds = array<i64: 1, 1>}, {transform_indices = @transform_1, window_bounds = array<i64: 1, 1, 4, 18, 18>}, {pipeline_mode = #tpu.pipeline_mode<synchronous>, transform_indices = @transform_2, window_bounds = array<i64: 9, 8, 4>}, {pipeline_mode = #tpu.pipeline_mode<synchronous>, transform_indices = @transform_3, window_bounds = array<i64: 8, 1>}, {transform_indices = @transform_4, window_bounds = array<i64: 1, 8, 256>}]} {
    %c0 = arith.constant 0 : index
    %c0_0 = arith.constant 0 : index
    %0 = memref.load %arg2[%c0, %c0_0] : memref<1x1xf32, #tpu.memory_space<smem>>
    %c0_1 = arith.constant 0 : index
    %c0_2 = arith.constant 0 : index
    %c0_3 = arith.constant 0 : index
    %c0_4 = arith.constant 0 : index
    %c0_5 = arith.constant 0 : index
    %1 = vector.load %arg3[%c0_1, %c0_2, %c0_3, %c0_4, %c0_5] : memref<1x1x4x18x18xbf16, #tpu.memory_space<vmem>>, vector<1x1x4x18x18xbf16>
    %2 = vector.shape_cast %1 : vector<1x1x4x18x18xbf16> to vector<4x18x18xbf16>
    %cst = arith.constant 0.000000e+00 : f32
    %3 = vector.broadcast %cst : f32 to vector<8x256xf32>
    %4 = vector.extract_strided_slice %2 {offsets = [0, 0, 0], sizes = [4, 16, 18], strides = [1, 1, 1]} : vector<4x18x18xbf16> to vector<4x16x18xbf16>
    %5 = vector.extract_strided_slice %4 {offsets = [0, 0, 0], sizes = [4, 16, 16], strides = [1, 1, 1]} : vector<4x16x18xbf16> to vector<4x16x16xbf16>
    %6 = vector.shape_cast %5 : vector<4x16x16xbf16> to vector<4x256xbf16>
    %c0_6 = arith.constant 0 : index
    %c0_7 = arith.constant 0 : index
    %c0_8 = arith.constant 0 : index
    %7 = vector.load %arg4[%c0_6, %c0_7, %c0_8] : memref<9x8x4xbf16, #tpu.memory_space<vmem>>, vector<1x8x4xbf16>
    %8 = vector.shape_cast %7 : vector<1x8x4xbf16> to vector<8x4xbf16>
    %cst_9 = arith.constant dense<0.000000e+00> : vector<8x256xf32>
    %9 = tpu.matmul %8, %6, %cst_9 {dimension_numbers = #tpu.dot_dimension_numbers<[1], [0], [0], [1], [0, 0, 1, 1], [], []>} : vector<8x4xbf16>, vector<4x256xbf16>, vector<8x256xf32> -> vector<8x256xf32>
    %10 = arith.addf %3, %9 : vector<8x256xf32>
    %11 = vector.extract_strided_slice %4 {offsets = [0, 0, 1], sizes = [4, 16, 16], strides = [1, 1, 1]} : vector<4x16x18xbf16> to vector<4x16x16xbf16>
    %12 = vector.shape_cast %11 : vector<4x16x16xbf16> to vector<4x256xbf16>
    %c1 = arith.constant 1 : index
    %c0_10 = arith.constant 0 : index
    %c0_11 = arith.constant 0 : index
    %13 = vector.load %arg4[%c1, %c0_10, %c0_11] : memref<9x8x4xbf16, #tpu.memory_space<vmem>>, vector<1x8x4xbf16>
    %14 = vector.shape_cast %13 : vector<1x8x4xbf16> to vector<8x4xbf16>
    %cst_12 = arith.constant dense<0.000000e+00> : vector<8x256xf32>
    %15 = tpu.matmul %14, %12, %cst_12 {dimension_numbers = #tpu.dot_dimension_numbers<[1], [0], [0], [1], [0, 0, 1, 1], [], []>} : vector<8x4xbf16>, vector<4x256xbf16>, vector<8x256xf32> -> vector<8x256xf32>
    %16 = arith.addf %10, %15 : vector<8x256xf32>
    %17 = vector.extract_strided_slice %4 {offsets = [0, 0, 2], sizes = [4, 16, 16], strides = [1, 1, 1]} : vector<4x16x18xbf16> to vector<4x16x16xbf16>
    %18 = vector.shape_cast %17 : vector<4x16x16xbf16> to vector<4x256xbf16>
    %c2 = arith.constant 2 : index
    %c0_13 = arith.constant 0 : index
    %c0_14 = arith.constant 0 : index
    %19 = vector.load %arg4[%c2, %c0_13, %c0_14] : memref<9x8x4xbf16, #tpu.memory_space<vmem>>, vector<1x8x4xbf16>
    %20 = vector.shape_cast %19 : vector<1x8x4xbf16> to vector<8x4xbf16>
    %cst_15 = arith.constant dense<0.000000e+00> : vector<8x256xf32>
    %21 = tpu.matmul %20, %18, %cst_15 {dimension_numbers = #tpu.dot_dimension_numbers<[1], [0], [0], [1], [0, 0, 1, 1], [], []>} : vector<8x4xbf16>, vector<4x256xbf16>, vector<8x256xf32> -> vector<8x256xf32>
    %22 = arith.addf %16, %21 : vector<8x256xf32>
    %23 = vector.extract_strided_slice %2 {offsets = [0, 1, 0], sizes = [4, 16, 18], strides = [1, 1, 1]} : vector<4x18x18xbf16> to vector<4x16x18xbf16>
    %24 = vector.extract_strided_slice %23 {offsets = [0, 0, 0], sizes = [4, 16, 16], strides = [1, 1, 1]} : vector<4x16x18xbf16> to vector<4x16x16xbf16>
    %25 = vector.shape_cast %24 : vector<4x16x16xbf16> to vector<4x256xbf16>
    %c3 = arith.constant 3 : index
    %c0_16 = arith.constant 0 : index
    %c0_17 = arith.constant 0 : index
    %26 = vector.load %arg4[%c3, %c0_16, %c0_17] : memref<9x8x4xbf16, #tpu.memory_space<vmem>>, vector<1x8x4xbf16>
    %27 = vector.shape_cast %26 : vector<1x8x4xbf16> to vector<8x4xbf16>
    %cst_18 = arith.constant dense<0.000000e+00> : vector<8x256xf32>
    %28 = tpu.matmul %27, %25, %cst_18 {dimension_numbers = #tpu.dot_dimension_numbers<[1], [0], [0], [1], [0, 0, 1, 1], [], []>} : vector<8x4xbf16>, vector<4x256xbf16>, vector<8x256xf32> -> vector<8x256xf32>
    %29 = arith.addf %22, %28 : vector<8x256xf32>
    %30 = vector.extract_strided_slice %23 {offsets = [0, 0, 1], sizes = [4, 16, 16], strides = [1, 1, 1]} : vector<4x16x18xbf16> to vector<4x16x16xbf16>
    %31 = vector.shape_cast %30 : vector<4x16x16xbf16> to vector<4x256xbf16>
    %c4 = arith.constant 4 : index
    %c0_19 = arith.constant 0 : index
    %c0_20 = arith.constant 0 : index
    %32 = vector.load %arg4[%c4, %c0_19, %c0_20] : memref<9x8x4xbf16, #tpu.memory_space<vmem>>, vector<1x8x4xbf16>
    %33 = vector.shape_cast %32 : vector<1x8x4xbf16> to vector<8x4xbf16>
    %cst_21 = arith.constant dense<0.000000e+00> : vector<8x256xf32>
    %34 = tpu.matmul %33, %31, %cst_21 {dimension_numbers = #tpu.dot_dimension_numbers<[1], [0], [0], [1], [0, 0, 1, 1], [], []>} : vector<8x4xbf16>, vector<4x256xbf16>, vector<8x256xf32> -> vector<8x256xf32>
    %35 = arith.addf %29, %34 : vector<8x256xf32>
    %36 = vector.extract_strided_slice %23 {offsets = [0, 0, 2], sizes = [4, 16, 16], strides = [1, 1, 1]} : vector<4x16x18xbf16> to vector<4x16x16xbf16>
    %37 = vector.shape_cast %36 : vector<4x16x16xbf16> to vector<4x256xbf16>
    %c5 = arith.constant 5 : index
    %c0_22 = arith.constant 0 : index
    %c0_23 = arith.constant 0 : index
    %38 = vector.load %arg4[%c5, %c0_22, %c0_23] : memref<9x8x4xbf16, #tpu.memory_space<vmem>>, vector<1x8x4xbf16>
    %39 = vector.shape_cast %38 : vector<1x8x4xbf16> to vector<8x4xbf16>
    %cst_24 = arith.constant dense<0.000000e+00> : vector<8x256xf32>
    %40 = tpu.matmul %39, %37, %cst_24 {dimension_numbers = #tpu.dot_dimension_numbers<[1], [0], [0], [1], [0, 0, 1, 1], [], []>} : vector<8x4xbf16>, vector<4x256xbf16>, vector<8x256xf32> -> vector<8x256xf32>
    %41 = arith.addf %35, %40 : vector<8x256xf32>
    %42 = vector.extract_strided_slice %2 {offsets = [0, 2, 0], sizes = [4, 16, 18], strides = [1, 1, 1]} : vector<4x18x18xbf16> to vector<4x16x18xbf16>
    %43 = vector.extract_strided_slice %42 {offsets = [0, 0, 0], sizes = [4, 16, 16], strides = [1, 1, 1]} : vector<4x16x18xbf16> to vector<4x16x16xbf16>
    %44 = vector.shape_cast %43 : vector<4x16x16xbf16> to vector<4x256xbf16>
    %c6 = arith.constant 6 : index
    %c0_25 = arith.constant 0 : index
    %c0_26 = arith.constant 0 : index
    %45 = vector.load %arg4[%c6, %c0_25, %c0_26] : memref<9x8x4xbf16, #tpu.memory_space<vmem>>, vector<1x8x4xbf16>
    %46 = vector.shape_cast %45 : vector<1x8x4xbf16> to vector<8x4xbf16>
    %cst_27 = arith.constant dense<0.000000e+00> : vector<8x256xf32>
    %47 = tpu.matmul %46, %44, %cst_27 {dimension_numbers = #tpu.dot_dimension_numbers<[1], [0], [0], [1], [0, 0, 1, 1], [], []>} : vector<8x4xbf16>, vector<4x256xbf16>, vector<8x256xf32> -> vector<8x256xf32>
    %48 = arith.addf %41, %47 : vector<8x256xf32>
    %49 = vector.extract_strided_slice %42 {offsets = [0, 0, 1], sizes = [4, 16, 16], strides = [1, 1, 1]} : vector<4x16x18xbf16> to vector<4x16x16xbf16>
    %50 = vector.shape_cast %49 : vector<4x16x16xbf16> to vector<4x256xbf16>
    %c7 = arith.constant 7 : index
    %c0_28 = arith.constant 0 : index
    %c0_29 = arith.constant 0 : index
    %51 = vector.load %arg4[%c7, %c0_28, %c0_29] : memref<9x8x4xbf16, #tpu.memory_space<vmem>>, vector<1x8x4xbf16>
    %52 = vector.shape_cast %51 : vector<1x8x4xbf16> to vector<8x4xbf16>
    %cst_30 = arith.constant dense<0.000000e+00> : vector<8x256xf32>
    %53 = tpu.matmul %52, %50, %cst_30 {dimension_numbers = #tpu.dot_dimension_numbers<[1], [0], [0], [1], [0, 0, 1, 1], [], []>} : vector<8x4xbf16>, vector<4x256xbf16>, vector<8x256xf32> -> vector<8x256xf32>
    %54 = arith.addf %48, %53 : vector<8x256xf32>
    %55 = vector.extract_strided_slice %42 {offsets = [0, 0, 2], sizes = [4, 16, 16], strides = [1, 1, 1]} : vector<4x16x18xbf16> to vector<4x16x16xbf16>
    %56 = vector.shape_cast %55 : vector<4x16x16xbf16> to vector<4x256xbf16>
    %c8 = arith.constant 8 : index
    %c0_31 = arith.constant 0 : index
    %c0_32 = arith.constant 0 : index
    %57 = vector.load %arg4[%c8, %c0_31, %c0_32] : memref<9x8x4xbf16, #tpu.memory_space<vmem>>, vector<1x8x4xbf16>
    %58 = vector.shape_cast %57 : vector<1x8x4xbf16> to vector<8x4xbf16>
    %cst_33 = arith.constant dense<0.000000e+00> : vector<8x256xf32>
    %59 = tpu.matmul %58, %56, %cst_33 {dimension_numbers = #tpu.dot_dimension_numbers<[1], [0], [0], [1], [0, 0, 1, 1], [], []>} : vector<8x4xbf16>, vector<4x256xbf16>, vector<8x256xf32> -> vector<8x256xf32>
    %60 = arith.addf %54, %59 : vector<8x256xf32>
    %61 = vector.broadcast %0 : f32 to vector<8x256xf32>
    %62 = arith.mulf %60, %61 : vector<8x256xf32>
    %c0_34 = arith.constant 0 : index
    %c0_35 = arith.constant 0 : index
    %63 = vector.load %arg5[%c0_34, %c0_35] : memref<8x1xf32, #tpu.memory_space<vmem>>, vector<8x1xf32>
    %64 = vector.broadcast %63 : vector<8x1xf32> to vector<8x256xf32>
    %65 = arith.addf %62, %64 : vector<8x256xf32>
    %c0_36 = arith.constant 0 : index
    %c0_37 = arith.constant 0 : index
    %c0_38 = arith.constant 0 : index
    %66 = vector.load %arg6[%c0_36, %c0_37, %c0_38] : memref<1x8x256xf32, #tpu.memory_space<vmem>>, vector<1x8x256xf32>
    %67 = vector.shape_cast %66 : vector<1x8x256xf32> to vector<8x256xf32>
    %68 = vector.shape_cast %65 : vector<8x256xf32> to vector<1x8x256xf32>
    tpu.vector_store %arg6[%c0_36, %c0_37, %c0_38], %68 {strides = array<i32>} : memref<1x8x256xf32, #tpu.memory_space<vmem>>, vector<1x8x256xf32>,
    return
  }
  func.func @transform_0(%arg0: i32, %arg1: i32) -> (i32, i32) {
    %c0_i32 = arith.constant 0 : i32
    %c0_i32_0 = arith.constant 0 : i32
    %c0_i32_1 = arith.constant 0 : i32
    return %c0_i32, %c0_i32_0 : i32, i32
  }
  func.func @transform_1(%arg0: i32, %arg1: i32) -> (i32, i32, i32, i32, i32) {
    %c0_i32 = arith.constant 0 : i32
    %c0_i32_0 = arith.constant 0 : i32
    %c0_i32_1 = arith.constant 0 : i32
    %c0_i32_2 = arith.constant 0 : i32
    return %arg0, %arg1, %c0_i32, %c0_i32_0, %c0_i32_1 : i32, i32, i32, i32, i32
  }
  func.func @transform_2(%arg0: i32, %arg1: i32) -> (i32, i32, i32) {
    %c0_i32 = arith.constant 0 : i32
    %c0_i32_0 = arith.constant 0 : i32
    %c0_i32_1 = arith.constant 0 : i32
    %c0_i32_2 = arith.constant 0 : i32
    return %c0_i32, %c0_i32_0, %c0_i32_1 : i32, i32, i32
  }
  func.func @transform_3(%arg0: i32, %arg1: i32) -> (i32, i32) {
    %c0_i32 = arith.constant 0 : i32
    %c0_i32_0 = arith.constant 0 : i32
    %c0_i32_1 = arith.constant 0 : i32
    return %c0_i32, %c0_i32_0 : i32, i32
  }
  func.func @transform_4(%arg0: i32, %arg1: i32) -> (i32, i32, i32) {
    %c0_i32 = arith.constant 0 : i32
    %c0_i32_0 = arith.constant 0 : i32
    return %arg0, %c0_i32, %arg1 : i32, i32, i32
  }
}

</mosaic_0001>

<llo_original>
// kernel: tpu_custom_call.1
$region0: #{tpu_custom_call.1}
  #allocation0 [shape = 'u32[]', space=smem, size = 0x4, offset = 0x4, fixed_abs, tag = 'smem constant byte address 0x4 - core index']
  #allocation1 [shape = 'u32[144,128]{1,0:T(1,128)}', space=vmem, size = 0x12000, scoped, tag = 'internal scratch']
  #allocation2 [shape = 'f32[1,1]{1,0:T(1,128)S(6)}', space=smem, size = 0x200, scoped, tag = 'scoped memory for tpu_custom_call.1']
  %s0 = inlined_call_operand.<no memory space> [shape: f32[1,1], index: 0, kind: input, shape index: {}]
  %s1 = inlined_call_operand.vmem [shape: bf16[2,1,4,18,18], index: 1, kind: input, shape index: {}]
  %s2 = inlined_call_operand.vmem [shape: bf16[9,8,4], index: 2, kind: input, shape index: {}]
  %s3 = inlined_call_operand.vmem [shape: f32[8,1], index: 3, kind: input, shape index: {}]
  %s4 = inlined_call_operand.hbm [shape: f32[2,8,256], index: 4, kind: output, shape index: {}]
  %s5 = sld [smem:[#allocation0]]
  $region49: #{tpu_custom_call.1} parent=0
    _
  %s7 = ssub.s32 1, %s5
  %s8 = scalar_select 0, %s7, %s5
  %9 = sst [smem:[#allocation2]] %s0
  $region1: #{tpu_custom_call.1} parent=0
    #allocation3 [shape = 'u8[16384]{0}', space=vmem, size = 0x4000, scoped, tag = 'output window, operand 0']
    #allocation4 [shape = 's32[2]{0}', space=sflag, size = 0x8, scoped, tag = 'scoped memory for tpu_custom_call.1']
    %10 = vsyncpa [#allocation4], 0
    %s11 = scalar_lea.sflag [#allocation4], 1
    %12 = vsyncpa %s11, 0
    loop: start=0, step=1, limit=4
    $region2: #{tpu_custom_call.1} parent=1 // loop_pre_header
      _
    $region3: #{tpu_custom_call.1} parent=1 // loop_header
      %s14 = sphi 0, %s18
      %p15 = scmp.ge.s32.totalorder %s14, 4
      %s21 = sphi 0, %s33
      %s22 = sphi 0, %s29
      %s23 = sphi 0, %s21
      %s24 = sphi 0, %s22
      %s25 = sphi 0, %s23
      %s26 = sphi 0, %s24
      %s34 = sphi 0, %s34
      %s36 = sphi 0, %s34
      %s37 = sphi 0, %s36
      %s51 = sphi 0, %s37
      %s59 = sphi 0, %s61
      %s62 = sphi 0, %s59
      %s63 = sphi 0, %s62
      %s79 = sphi 0, %s63
      %s83 = sphi 0, %s83
      %s85 = sphi 0, %s83
      %s86 = sphi 0, %s85
      %s100 = sphi 0, %s86
      %s104 = sphi 0, %s104
      %s106 = sphi 0, %s104
      %s107 = sphi 0, %s106
      %s121 = sphi 0, %s107
      %s129 = sphi 0, %s131
      %s132 = sphi 0, %s129
      %s133 = sphi 0, %s132
      %s149 = sphi 0, %s133
    $region4: #{tpu_custom_call.1} parent=1 // loop_header_branch
      %17 = sbr.rel (%p15) target = $region8
    $region5: #{tpu_custom_call.1} parent=1 // loop_body
      %s19 = ssub.s32 %s14, 1
      %s20 = ssub.s32 %s14, 2
      %s27 = sadd.s32 1, %s22
      %p28 = scmp.ge.s32.totalorder %s27, 1
      %s29 = scalar_select %p28, 0, %s27
      %s30 = sadd.s32 1, %s21
      %s31 = scalar_select %p28, %s30, %s21
      %p32 = scmp.ge.s32.totalorder %s31, 2
      %s33 = scalar_select %p32, 0, %s31
      %s35 = sadd.s32 %s34, 1
      %p38 = scmp.eq.s32.totalorder %s14, 1
      %p39 = scmp.ne.s32.totalorder %s34, %s36
      %p40 = scmp.eq.s32.totalorder %s14, 0
      %p41 = por %p39, %p40
      %p42 = scmp.ne.s32.totalorder %s34, %s36
      %p43 = scmp.eq.s32.totalorder %s19, 1
      %p44 = por %p42, %p43
      %p45 = scmp.ne.s32.totalorder %s36, %s37
      %p46 = scmp.eq.s32.totalorder %s19, 0
      %p47 = por %p45, %p46
      %p48 = scmp.ne.s32.totalorder %s36, %s37
      %p49 = scmp.eq.s32.totalorder %s20, 1
      %p50 = por %p48, %p49
      %p52 = scmp.ne.s32.totalorder %s37, %s51
      %p53 = scmp.eq.s32.totalorder %s20, 0
      %p54 = por %p52, %p53
      %s55 = ssub.s32 %s21, %s33
      %s56 = ssub.s32 %s22, %s29
      %s57 = sor.u32 %s55, %s56
      %p58 = scmp.eq.s32.totalorder %s57, 0
      %s60 = sadd.s32 %s59, 1
      %s61 = scalar_select %p58, %s59, %s60
      %p64 = pneg %p58
      %p65 = scmp.eq.s32.totalorder %s14, 1
      %p66 = por %p64, %p65
      %p67 = scmp.ne.s32.totalorder %s59, %s62
      %p68 = scmp.eq.s32.totalorder %s14, 0
      %p69 = por %p67, %p68
      %p70 = scmp.ne.s32.totalorder %s59, %s62
      %p71 = scmp.eq.s32.totalorder %s19, 1
      %p72 = por %p70, %p71
      %p73 = scmp.ne.s32.totalorder %s62, %s63
      %p74 = scmp.eq.s32.totalorder %s19, 0
      %p75 = por %p73, %p74
      %p76 = scmp.ne.s32.totalorder %s62, %s63
      %p77 = scmp.eq.s32.totalorder %s20, 1
      %p78 = por %p76, %p77
      %p80 = scmp.ne.s32.totalorder %s63, %s79
      %p81 = scmp.eq.s32.totalorder %s20, 0
      %p82 = por %p80, %p81
      %s84 = sadd.s32 %s83, 1
      %p87 = scmp.eq.s32.totalorder %s14, 1
      %p88 = scmp.ne.s32.totalorder %s83, %s85
      %p89 = scmp.eq.s32.totalorder %s14, 0
      %p90 = por %p88, %p89
      %p91 = scmp.ne.s32.totalorder %s83, %s85
      %p92 = scmp.eq.s32.totalorder %s19, 1
      %p93 = por %p91, %p92
      %p94 = scmp.ne.s32.totalorder %s85, %s86
      %p95 = scmp.eq.s32.totalorder %s19, 0
      %p96 = por %p94, %p95
      %p97 = scmp.ne.s32.totalorder %s85, %s86
      %p98 = scmp.eq.s32.totalorder %s20, 1
      %p99 = por %p97, %p98
      %p101 = scmp.ne.s32.totalorder %s86, %s100
      %p102 = scmp.eq.s32.totalorder %s20, 0
      %p103 = por %p101, %p102
      %s105 = sadd.s32 %s104, 1
      %p108 = scmp.eq.s32.totalorder %s14, 1
      %p109 = scmp.ne.s32.totalorder %s104, %s106
      %p110 = scmp.eq.s32.totalorder %s14, 0
      %p111 = por %p109, %p110
      %p112 = scmp.ne.s32.totalorder %s104, %s106
      %p113 = scmp.eq.s32.totalorder %s19, 1
      %p114 = por %p112, %p113
      %p115 = scmp.ne.s32.totalorder %s106, %s107
      %p116 = scmp.eq.s32.totalorder %s19, 0
      %p117 = por %p115, %p116
      %p118 = scmp.ne.s32.totalorder %s106, %s107
      %p119 = scmp.eq.s32.totalorder %s20, 1
      %p120 = por %p118, %p119
      %p122 = scmp.ne.s32.totalorder %s107, %s121
      %p123 = scmp.eq.s32.totalorder %s20, 0
      %p124 = por %p122, %p123
      %s125 = ssub.s32 %s21, %s33
      %s126 = ssub.s32 %s22, %s29
      %s127 = sor.u32 %s125, %s126
      %p128 = scmp.eq.s32.totalorder %s127, 0
      %s130 = sadd.s32 %s129, 1
      %s131 = scalar_select %p128, %s129, %s130
      %p134 = pneg %p128
      %p135 = scmp.eq.s32.totalorder %s14, 1
      %p136 = por %p134, %p135
      %p137 = scmp.ne.s32.totalorder %s129, %s132
      %p138 = scmp.eq.s32.totalorder %s14, 0
      %p139 = por %p137, %p138
      %p140 = scmp.ne.s32.totalorder %s129, %s132
      %p141 = scmp.eq.s32.totalorder %s19, 1
      %p142 = por %p140, %p141
      %p143 = scmp.ne.s32.totalorder %s132, %s133
      %p144 = scmp.eq.s32.totalorder %s19, 0
      %p145 = por %p143, %p144
      %p146 = scmp.ne.s32.totalorder %s132, %s133
      %p147 = scmp.eq.s32.totalorder %s20, 1
      %p148 = por %p146, %p147
      %p150 = scmp.ne.s32.totalorder %s133, %s149
      %p151 = scmp.eq.s32.totalorder %s20, 0
      %p152 = por %p150, %p151
      %p153 = scmp.le.s32.totalorder 1, %s14
      %p154 = scmp.lt.s32.totalorder %s14, 3
      %p155 = pnand %p153, %p154
      %p156 = pneg %p155
      // Predicated region
      $region9: #{tpu_custom_call.1} parent=5 // pred_check
        _
      $region10: #{tpu_custom_call.1} parent=5 // pred_check_branch
        %158 = sbr.rel (%p155) target = $region12
      $region11: #{tpu_custom_call.1} parent=5 // pred_region
        %s159 = ssub.s32 %s14, 1
        // Predicated region
        $region13: #{tpu_custom_call.1} parent=11 // pred_check
          %p160 = pneg %p47
        $region14: #{tpu_custom_call.1} parent=11 // pred_check_branch
          %162 = sbr.rel (%p160) target = $region16
        $region15: #{tpu_custom_call.1} parent=11 // pred_region
          _
        $region16: #{tpu_custom_call.1} parent=11 // pred_fallthru
          _
        // Predicated region
        $region17: #{tpu_custom_call.1} parent=11 // pred_check
          %p163 = pneg %p96
        $region18: #{tpu_custom_call.1} parent=11 // pred_check_branch
          %165 = sbr.rel (%p163) target = $region20
        $region19: #{tpu_custom_call.1} parent=11 // pred_region
          _
        $region20: #{tpu_custom_call.1} parent=11 // pred_fallthru
          _
        // Predicated region
        $region21: #{tpu_custom_call.1} parent=11 // pred_check
          %p166 = pneg %p117
        $region22: #{tpu_custom_call.1} parent=11 // pred_check_branch
          %168 = sbr.rel (%p166) target = $region24
        $region23: #{tpu_custom_call.1} parent=11 // pred_region
          _
        $region24: #{tpu_custom_call.1} parent=11 // pred_fallthru
          _
      $region12: #{tpu_custom_call.1} parent=5 // pred_fallthru
        _
      %p169 = scmp.lt.s32.totalorder %s14, 2
      // Predicated region
      $region25: #{tpu_custom_call.1} parent=5 // pred_check
        %p170 = pneg %p169
      $region26: #{tpu_custom_call.1} parent=5 // pred_check_branch
        %172 = sbr.rel (%p170) target = $region28
      $region27: #{tpu_custom_call.1} parent=5 // pred_region
        // Predicated region
        $region29: #{tpu_custom_call.1} parent=27 // pred_check
          %p173 = pneg %p69
        $region30: #{tpu_custom_call.1} parent=27 // pred_check_branch
          %175 = sbr.rel (%p173) target = $region32
        $region31: #{tpu_custom_call.1} parent=27 // pred_region
          %p176 = scmp.lt.s32.totalorder %s21, 1
          %s177 = scalar_select %p176, %s21, 1
          %p178 = scmp.lt.s32.totalorder %s22, 0
          %s179 = scalar_select %p178, %s22, 0
          %s180 = smul.addr %s179, 12
          %s181 = smul.addr %s177, 12
          %s182 = sadd.s32 %s180, %s181
          %s183 = smul.addr %s182, 4
          %s184 = scalar_lea.vmem %s1, %s183
        $region32: #{tpu_custom_call.1} parent=27 // pred_fallthru
          _
      $region28: #{tpu_custom_call.1} parent=5 // pred_fallthru
        _
      %p185 = scmp.le.s32.totalorder 1, %s14
      %p186 = scmp.lt.s32.totalorder %s14, 3
      %p187 = pnand %p185, %p186
      %p188 = pneg %p187
      // Predicated region
      $region33: #{tpu_custom_call.1} parent=5 // pred_check
        _
      $region34: #{tpu_custom_call.1} parent=5 // pred_check_branch
        %190 = sbr.rel (%p187) target = $region36
      $region35: #{tpu_custom_call.1} parent=5 // pred_region
        %s191 = ssub.s32 %s14, 1
        %p192 = pneg %p47
        %p193 = pneg %p44
        %p194 = scmp.lt.s32.totalorder %s23, 1
        %s195 = scalar_select %p194, %s23, 1
        %p196 = scmp.lt.s32.totalorder %s24, 0
        %s197 = scalar_select %p196, %s24, 0
        %s198 = smul.addr %s197, 12
        %s199 = smul.addr %s195, 12
        %s200 = sadd.s32 %s198, %s199
        %s201 = smul.addr %s200, 4
        %s202 = scalar_lea.vmem %s1, %s201
        %p203 = pneg %p75
        %p204 = pneg %p72
        %p205 = pneg %p96
        %p206 = pneg %p93
        %p207 = pneg %p117
        %p208 = pneg %p114
        %p209 = pneg %p145
        %p210 = pneg %p142
        %s211 = sand.u32 %s132, 1
        %s212 = scalar_lea.sflag [#allocation4], %s211
        %s213 = sand.u32 %s132, 1
        %s214 = smul.addr %s213, 16
        %s215 = scalar_lea.vmem [#allocation3], %s214
        %p216 = scmp.lt.s32.totalorder %s23, 1
        %s217 = scalar_select %p216, %s23, 1
        %p218 = scmp.lt.s32.totalorder %s24, 0
        %s219 = scalar_select %p218, %s24, 0
        %s220 = smul.addr %s219, 12
        %s221 = smul.addr %s217, 12
        %s222 = sadd.s32 %s220, %s221
        %s223 = smul.addr %s222, 4
        %s224 = scalar_lea.vmem %s1, %s223
        %s225 = smul.u32 2, %s24
        %s227 = sld [smem:[#allocation2]]
        %v228 = vld [vmem:[%s224] sm:$0xf]
        %v229 = vld [vmem:[%s224 + $0x4] sm:$0xf]
        %v230 = vld [vmem:[%s224 + $0x8] sm:$0x1]
        %v231 = vld [vmem:[%s224 + $0xc] sm:$0xf]
        %v232 = vld [vmem:[%s224 + $0x10] sm:$0xf]
        %v233 = vld [vmem:[%s224 + $0x14] sm:$0x1]
        %v234 = vld [vmem:[%s224 + $0x18] sm:$0xf]
        %v235 = vld [vmem:[%s224 + $0x1c] sm:$0xf]
        %v236 = vld [vmem:[%s224 + $0x20] sm:$0x1]
        %v237 = vld [vmem:[%s224 + $0x24] sm:$0xf]
        %v238 = vld [vmem:[%s224 + $0x28] sm:$0xf]
        %v239 = vld [vmem:[%s224 + $0x2c] sm:$0x1]
        %v242 = vpack.i.b16 %v231, %v228
        %v243 = vshrl.u32 %v228, 16
        %v244 = vshrl.u32 %v231, 16
        %v245 = vpack.i.b16 %v244, %v243
        %v248 = vpack.i.b16 %v237, %v234
        %v249 = vshrl.u32 %v234, 16
        %v250 = vshrl.u32 %v237, 16
        %v251 = vpack.i.b16 %v250, %v249
        %v254 = vpack.i.b16 %v232, %v229
        %v255 = vshrl.u32 %v229, 16
        %v256 = vshrl.u32 %v232, 16
        %v257 = vpack.i.b16 %v256, %v255
        %v260 = vpack.i.b16 %v238, %v235
        %v261 = vshrl.u32 %v235, 16
        %v262 = vshrl.u32 %v238, 16
        %v263 = vpack.i.b16 %v262, %v261
        %v266 = vunpack.c.l.s4 1983009808
        %v267 = vunpack.c.0.s8 %v266
        %v268 = vlaneseq
        %v269 = vshrl.u32 %v268, 7
        %v270 = vsub.s32 %v267, %v269
        %v271 = vrot.slane %v242, %v270
        %v274 = vunpack.c.l.s4 1983009808
        %v275 = vunpack.c.0.s8 %v274
        %v276 = vlaneseq
        %v277 = vshrl.u32 %v276, 7
        %v278 = vsub.s32 %v275, %v277
        %v279 = vrot.slane %v248, %v278
        %v280 = vcombine.low %v271, %v279
        %v281 = vcombine.high %v271, %v279
        %v283 = vunpack.c.l.s4 1934713408
        %v284 = vunpack.c.0.s8 %v283
        %v285 = vlaneseq
        %v286 = vshrl.u32 %v285, 7
        %v287 = vsub.s32 %v284, %v286
        %v288 = vrot.slane %v280, %v287
        %v290 = vunpack.c.l.s4 1934713408
        %v291 = vunpack.c.0.s8 %v290
        %v292 = vlaneseq
        %v293 = vshrl.u32 %v292, 7
        %v294 = vsub.s32 %v291, %v293
        %v295 = vrot.slane %v281, %v294
        %v296 = vcombine.high %v288, 0
        %v297 = vcombine.high %v295, 0
        %v300 = vunpack.c.l.s4 1983009808
        %v301 = vunpack.c.0.s8 %v300
        %v302 = vlaneseq
        %v303 = vshrl.u32 %v302, 7
        %v304 = vsub.s32 %v301, %v303
        %v305 = vrot.slane %v245, %v304
        %v308 = vunpack.c.l.s4 1983009808
        %v309 = vunpack.c.0.s8 %v308
        %v310 = vlaneseq
        %v311 = vshrl.u32 %v310, 7
        %v312 = vsub.s32 %v309, %v311
        %v313 = vrot.slane %v251, %v312
        %v314 = vcombine.low %v305, %v313
        %v315 = vcombine.high %v305, %v313
        %v317 = vunpack.c.l.s4 1934713408
        %v318 = vunpack.c.0.s8 %v317
        %v319 = vlaneseq
        %v320 = vshrl.u32 %v319, 7
        %v321 = vsub.s32 %v318, %v320
        %v322 = vrot.slane %v314, %v321
        %v324 = vunpack.c.l.s4 1934713408
        %v325 = vunpack.c.0.s8 %v324
        %v326 = vlaneseq
        %v327 = vshrl.u32 %v326, 7
        %v328 = vsub.s32 %v325, %v327
        %v329 = vrot.slane %v315, %v328
        %v330 = vcombine.high %v322, 0
        %v331 = vcombine.high %v329, 0
        %v334 = vunpack.c.l.s4 1983009808
        %v335 = vunpack.c.0.s8 %v334
        %v336 = vlaneseq
        %v337 = vshrl.u32 %v336, 7
        %v338 = vsub.s32 %v335, %v337
        %v339 = vrot.slane %v254, %v338
        %v342 = vunpack.c.l.s4 1983009808
        %v343 = vunpack.c.0.s8 %v342
        %v344 = vlaneseq
        %v345 = vshrl.u32 %v344, 7
        %v346 = vsub.s32 %v343, %v345
        %v347 = vrot.slane %v260, %v346
        %v348 = vcombine.low %v339, %v347
        %v349 = vcombine.high %v339, %v347
        %v351 = vunpack.c.l.s4 1934713408
        %v352 = vunpack.c.0.s8 %v351
        %v353 = vlaneseq
        %v354 = vshrl.u32 %v353, 7
        %v355 = vsub.s32 %v352, %v354
        %v356 = vrot.slane %v348, %v355
        %v358 = vunpack.c.l.s4 1934713408
        %v359 = vunpack.c.0.s8 %v358
        %v360 = vlaneseq
        %v361 = vshrl.u32 %v360, 7
        %v362 = vsub.s32 %v359, %v361
        %v363 = vrot.slane %v349, %v362
        %v364 = vcombine.high %v356, 0
        %v365 = vcombine.high %v363, 0
        %v368 = vunpack.c.l.s4 1983009808
        %v369 = vunpack.c.0.s8 %v368
        %v370 = vlaneseq
        %v371 = vshrl.u32 %v370, 7
        %v372 = vsub.s32 %v369, %v371
        %v373 = vrot.slane %v257, %v372
        %v376 = vunpack.c.l.s4 1983009808
        %v377 = vunpack.c.0.s8 %v376
        %v378 = vlaneseq
        %v379 = vshrl.u32 %v378, 7
        %v380 = vsub.s32 %v377, %v379
        %v381 = vrot.slane %v263, %v380
        %v382 = vcombine.low %v373, %v381
        %v383 = vcombine.high %v373, %v381
        %v385 = vunpack.c.l.s4 1934713408
        %v386 = vunpack.c.0.s8 %v385
        %v387 = vlaneseq
        %v388 = vshrl.u32 %v387, 7
        %v389 = vsub.s32 %v386, %v388
        %v390 = vrot.slane %v382, %v389
        %v392 = vunpack.c.l.s4 1934713408
        %v393 = vunpack.c.0.s8 %v392
        %v394 = vlaneseq
        %v395 = vshrl.u32 %v394, 7
        %v396 = vsub.s32 %v393, %v395
        %v397 = vrot.slane %v383, %v396
        %v398 = vcombine.high %v390, 0
        %v399 = vcombine.high %v397, 0
        %v401 = vunpack.c.l.b16 %v322
        %v402 = vpack.c.b16 %v401, %v401
        %403 = vrot.lane.b32.xlu0 %v402, 16
        %v404 = vpop.permute.xlu0 %403
        %v406 = vunpack.c.l.b16 %v296
        %v407 = vpack.c.b16 %v406, %v406
        %408 = vrot.lane.b32.xlu0 %v407, 32
        %v409 = vpop.permute.xlu0 %408
        %v411 = vunpack.c.l.b16 %v330
        %v412 = vpack.c.b16 %v411, %v411
        %413 = vrot.lane.b32.xlu0 %v412, 48
        %v414 = vpop.permute.xlu0 %413
        %v416 = vunpack.c.l.b16 %v295
        %v417 = vpack.c.b16 %v416, %v416
        %418 = vrot.lane.b32.xlu0 %v417, 64
        %v419 = vpop.permute.xlu0 %418
        %v421 = vunpack.c.l.b16 %v329
        %v422 = vpack.c.b16 %v421, %v421
        %423 = vrot.lane.b32.xlu0 %v422, 80
        %v424 = vpop.permute.xlu0 %423
        %v426 = vunpack.c.l.b16 %v297
        %v427 = vpack.c.b16 %v426, %v426
        %428 = vrot.lane.b32.xlu0 %v427, 96
        %v429 = vpop.permute.xlu0 %428
        %v431 = vunpack.c.l.b16 %v331
        %v432 = vpack.c.b16 %v431, %v431
        %433 = vrot.lane.b32.xlu0 %v432, 112
        %v434 = vpop.permute.xlu0 %433
        %v436 = vunpack.c.l.b16 %v390
        %v437 = vpack.c.b16 %v436, %v436
        %438 = vrot.lane.b32.xlu0 %v437, 16
        %v439 = vpop.permute.xlu0 %438
        %v441 = vunpack.c.l.b16 %v364
        %v442 = vpack.c.b16 %v441, %v441
        %443 = vrot.lane.b32.xlu0 %v442, 32
        %v444 = vpop.permute.xlu0 %443
        %v446 = vunpack.c.l.b16 %v398
        %v447 = vpack.c.b16 %v446, %v446
        %448 = vrot.lane.b32.xlu0 %v447, 48
        %v449 = vpop.permute.xlu0 %448
        %v451 = vunpack.c.l.b16 %v363
        %v452 = vpack.c.b16 %v451, %v451
        %453 = vrot.lane.b32.xlu0 %v452, 64
        %v454 = vpop.permute.xlu0 %453
        %v456 = vunpack.c.l.b16 %v397
        %v457 = vpack.c.b16 %v456, %v456
        %458 = vrot.lane.b32.xlu0 %v457, 80
        %v459 = vpop.permute.xlu0 %458
        %v461 = vunpack.c.l.b16 %v365
        %v462 = vpack.c.b16 %v461, %v461
        %463 = vrot.lane.b32.xlu0 %v462, 96
        %v464 = vpop.permute.xlu0 %463
        %v466 = vunpack.c.l.b16 %v399
        %v467 = vpack.c.b16 %v466, %v466
        %468 = vrot.lane.b32.xlu0 %v467, 112
        %v469 = vpop.permute.xlu0 %468
        %vm470 = vcmask 130048
        %v473 = vsel %vm470, %v288, %v404
        %vm474 = vcmask 261120
        %v476 = vsel %vm474, %v473, %v409
        %vm477 = vcmask 392192
        %v479 = vsel %vm477, %v476, %v414
        %vm480 = vcmask 523264
        %v482 = vsel %vm480, %v479, %v419
        %vm483 = vcmask 654336
        %v485 = vsel %vm483, %v482, %v424
        %vm486 = vcmask 785408
        %v488 = vsel %vm486, %v485, %v429
        %vm489 = vcmask 916480
        %v491 = vsel %vm489, %v488, %v434
        %v494 = vsel %vm470, %v356, %v439
        %v496 = vsel %vm474, %v494, %v444
        %v498 = vsel %vm477, %v496, %v449
        %v500 = vsel %vm480, %v498, %v454
        %v502 = vsel %vm483, %v500, %v459
        %v504 = vsel %vm486, %v502, %v464
        %v506 = vsel %vm489, %v504, %v469
        %v507 = vld [vmem:[%s2] sm:$0xf]
        %516 = vrot.lane.b32.xlu0 %v228, 127
        %v517 = vpop.permute.xlu0 %516
        %518 = vrot.lane.b32.xlu0 %v229, 127
        %v519 = vpop.permute.xlu0 %518
        %520 = vrot.lane.b32.xlu0 %v231, 127
        %v521 = vpop.permute.xlu0 %520
        %522 = vrot.lane.b32.xlu0 %v232, 127
        %v523 = vpop.permute.xlu0 %522
        %524 = vrot.lane.b32.xlu0 %v234, 127
        %v525 = vpop.permute.xlu0 %524
        %526 = vrot.lane.b32.xlu0 %v235, 127
        %v527 = vpop.permute.xlu0 %526
        %528 = vrot.lane.b32.xlu0 %v237, 127
        %v529 = vpop.permute.xlu0 %528
        %530 = vrot.lane.b32.xlu0 %v238, 127
        %v531 = vpop.permute.xlu0 %530
        %v534 = vpack.i.b16 %v521, %v517
        %v535 = vshrl.u32 %v517, 16
        %v536 = vshrl.u32 %v521, 16
        %v537 = vpack.i.b16 %v536, %v535
        %v540 = vpack.i.b16 %v529, %v525
        %v541 = vshrl.u32 %v525, 16
        %v542 = vshrl.u32 %v529, 16
        %v543 = vpack.i.b16 %v542, %v541
        %v546 = vpack.i.b16 %v523, %v519
        %v547 = vshrl.u32 %v519, 16
        %v548 = vshrl.u32 %v523, 16
        %v549 = vpack.i.b16 %v548, %v547
        %v552 = vpack.i.b16 %v531, %v527
        %v553 = vshrl.u32 %v527, 16
        %v554 = vshrl.u32 %v531, 16
        %v555 = vpack.i.b16 %v554, %v553
        %v558 = vunpack.c.l.s4 1983009808
        %v559 = vunpack.c.0.s8 %v558
        %v560 = vlaneseq
        %v561 = vshrl.u32 %v560, 7
        %v562 = vsub.s32 %v559, %v561
        %v563 = vrot.slane %v534, %v562
        %v566 = vunpack.c.l.s4 1983009808
        %v567 = vunpack.c.0.s8 %v566
        %v568 = vlaneseq
        %v569 = vshrl.u32 %v568, 7
        %v570 = vsub.s32 %v567, %v569
        %v571 = vrot.slane %v540, %v570
        %v572 = vcombine.low %v563, %v571
        %v573 = vcombine.high %v563, %v571
        %v575 = vunpack.c.l.s4 1934713408
        %v576 = vunpack.c.0.s8 %v575
        %v577 = vlaneseq
        %v578 = vshrl.u32 %v577, 7
        %v579 = vsub.s32 %v576, %v578
        %v580 = vrot.slane %v572, %v579
        %v582 = vunpack.c.l.s4 1934713408
        %v583 = vunpack.c.0.s8 %v582
        %v584 = vlaneseq
        %v585 = vshrl.u32 %v584, 7
        %v586 = vsub.s32 %v583, %v585
        %v587 = vrot.slane %v573, %v586
        %v588 = vcombine.high %v580, 0
        %v589 = vcombine.high %v587, 0
        %v592 = vunpack.c.l.s4 1983009808
        %v593 = vunpack.c.0.s8 %v592
        %v594 = vlaneseq
        %v595 = vshrl.u32 %v594, 7
        %v596 = vsub.s32 %v593, %v595
        %v597 = vrot.slane %v537, %v596
        %v600 = vunpack.c.l.s4 1983009808
        %v601 = vunpack.c.0.s8 %v600
        %v602 = vlaneseq
        %v603 = vshrl.u32 %v602, 7
        %v604 = vsub.s32 %v601, %v603
        %v605 = vrot.slane %v543, %v604
        %v606 = vcombine.low %v597, %v605
        %v607 = vcombine.high %v597, %v605
        %v609 = vunpack.c.l.s4 1934713408
        %v610 = vunpack.c.0.s8 %v609
        %v611 = vlaneseq
        %v612 = vshrl.u32 %v611, 7
        %v613 = vsub.s32 %v610, %v612
        %v614 = vrot.slane %v606, %v613
        %v616 = vunpack.c.l.s4 1934713408
        %v617 = vunpack.c.0.s8 %v616
        %v618 = vlaneseq
        %v619 = vshrl.u32 %v618, 7
        %v620 = vsub.s32 %v617, %v619
        %v621 = vrot.slane %v607, %v620
        %v622 = vcombine.high %v614, 0
        %v623 = vcombine.high %v621, 0
        %v626 = vunpack.c.l.s4 1983009808
        %v627 = vunpack.c.0.s8 %v626
        %v628 = vlaneseq
        %v629 = vshrl.u32 %v628, 7
        %v630 = vsub.s32 %v627, %v629
        %v631 = vrot.slane %v546, %v630
        %v634 = vunpack.c.l.s4 1983009808
        %v635 = vunpack.c.0.s8 %v634
        %v636 = vlaneseq
        %v637 = vshrl.u32 %v636, 7
        %v638 = vsub.s32 %v635, %v637
        %v639 = vrot.slane %v552, %v638
        %v640 = vcombine.low %v631, %v639
        %v641 = vcombine.high %v631, %v639
        %v643 = vunpack.c.l.s4 1934713408
        %v644 = vunpack.c.0.s8 %v643
        %v645 = vlaneseq
        %v646 = vshrl.u32 %v645, 7
        %v647 = vsub.s32 %v644, %v646
        %v648 = vrot.slane %v640, %v647
        %v650 = vunpack.c.l.s4 1934713408
        %v651 = vunpack.c.0.s8 %v650
        %v652 = vlaneseq
        %v653 = vshrl.u32 %v652, 7
        %v654 = vsub.s32 %v651, %v653
        %v655 = vrot.slane %v641, %v654
        %v656 = vcombine.high %v648, 0
        %v657 = vcombine.high %v655, 0
        %v660 = vunpack.c.l.s4 1983009808
        %v661 = vunpack.c.0.s8 %v660
        %v662 = vlaneseq
        %v663 = vshrl.u32 %v662, 7
        %v664 = vsub.s32 %v661, %v663
        %v665 = vrot.slane %v549, %v664
        %v668 = vunpack.c.l.s4 1983009808
        %v669 = vunpack.c.0.s8 %v668
        %v670 = vlaneseq
        %v671 = vshrl.u32 %v670, 7
        %v672 = vsub.s32 %v669, %v671
        %v673 = vrot.slane %v555, %v672
        %v674 = vcombine.low %v665, %v673
        %v675 = vcombine.high %v665, %v673
        %v677 = vunpack.c.l.s4 1934713408
        %v678 = vunpack.c.0.s8 %v677
        %v679 = vlaneseq
        %v680 = vshrl.u32 %v679, 7
        %v681 = vsub.s32 %v678, %v680
        %v682 = vrot.slane %v674, %v681
        %v684 = vunpack.c.l.s4 1934713408
        %v685 = vunpack.c.0.s8 %v684
        %v686 = vlaneseq
        %v687 = vshrl.u32 %v686, 7
        %v688 = vsub.s32 %v685, %v687
        %v689 = vrot.slane %v675, %v688
        %v690 = vcombine.high %v682, 0
        %v691 = vcombine.high %v689, 0
        %v693 = vunpack.c.l.b16 %v614
        %v694 = vpack.c.b16 %v693, %v693
        %695 = vrot.lane.b32.xlu0 %v694, 16
        %v696 = vpop.permute.xlu0 %695
        %v698 = vunpack.c.l.b16 %v588
        %v699 = vpack.c.b16 %v698, %v698
        %700 = vrot.lane.b32.xlu0 %v699, 32
        %v701 = vpop.permute.xlu0 %700
        %v703 = vunpack.c.l.b16 %v622
        %v704 = vpack.c.b16 %v703, %v703
        %705 = vrot.lane.b32.xlu0 %v704, 48
        %v706 = vpop.permute.xlu0 %705
        %v708 = vunpack.c.l.b16 %v587
        %v709 = vpack.c.b16 %v708, %v708
        %710 = vrot.lane.b32.xlu0 %v709, 64
        %v711 = vpop.permute.xlu0 %710
        %v713 = vunpack.c.l.b16 %v621
        %v714 = vpack.c.b16 %v713, %v713
        %715 = vrot.lane.b32.xlu0 %v714, 80
        %v716 = vpop.permute.xlu0 %715
        %v718 = vunpack.c.l.b16 %v589
        %v719 = vpack.c.b16 %v718, %v718
        %720 = vrot.lane.b32.xlu0 %v719, 96
        %v721 = vpop.permute.xlu0 %720
        %v723 = vunpack.c.l.b16 %v623
        %v724 = vpack.c.b16 %v723, %v723
        %725 = vrot.lane.b32.xlu0 %v724, 112
        %v726 = vpop.permute.xlu0 %725
        %v728 = vunpack.c.l.b16 %v682
        %v729 = vpack.c.b16 %v728, %v728
        %730 = vrot.lane.b32.xlu0 %v729, 16
        %v731 = vpop.permute.xlu0 %730
        %v733 = vunpack.c.l.b16 %v656
        %v734 = vpack.c.b16 %v733, %v733
        %735 = vrot.lane.b32.xlu0 %v734, 32
        %v736 = vpop.permute.xlu0 %735
        %v738 = vunpack.c.l.b16 %v690
        %v739 = vpack.c.b16 %v738, %v738
        %740 = vrot.lane.b32.xlu0 %v739, 48
        %v741 = vpop.permute.xlu0 %740
        %v743 = vunpack.c.l.b16 %v655
        %v744 = vpack.c.b16 %v743, %v743
        %745 = vrot.lane.b32.xlu0 %v744, 64
        %v746 = vpop.permute.xlu0 %745
        %v748 = vunpack.c.l.b16 %v689
        %v749 = vpack.c.b16 %v748, %v748
        %750 = vrot.lane.b32.xlu0 %v749, 80
        %v751 = vpop.permute.xlu0 %750
        %v753 = vunpack.c.l.b16 %v657
        %v754 = vpack.c.b16 %v753, %v753
        %755 = vrot.lane.b32.xlu0 %v754, 96
        %v756 = vpop.permute.xlu0 %755
        %v758 = vunpack.c.l.b16 %v691
        %v759 = vpack.c.b16 %v758, %v758
        %760 = vrot.lane.b32.xlu0 %v759, 112
        %v761 = vpop.permute.xlu0 %760
        %v764 = vsel %vm470, %v580, %v696
        %v766 = vsel %vm474, %v764, %v701
        %v768 = vsel %vm477, %v766, %v706
        %v770 = vsel %vm480, %v768, %v711
        %v772 = vsel %vm483, %v770, %v716
        %v774 = vsel %vm486, %v772, %v721
        %v776 = vsel %vm489, %v774, %v726
        %v779 = vsel %vm470, %v648, %v731
        %v781 = vsel %vm474, %v779, %v736
        %v783 = vsel %vm477, %v781, %v741
        %v785 = vsel %vm480, %v783, %v746
        %v787 = vsel %vm483, %v785, %v751
        %v789 = vsel %vm486, %v787, %v756
        %v791 = vsel %vm489, %v789, %v761
        %s792 = scalar_lea.vmem %s2, 4
        %v793 = vld [vmem:[%s792] sm:$0xf]
        %vm794 = vcmask 31744
        %v796 = vsel %vm794, %v793, 0
        %vm798 = vcmask 1041408
        %v799 = vsel %vm798, %v776, 0
        %v801 = vsel %vm798, %v791, 0
        %803 = vmatprep.subr.bf16.mxu0 %v801
        %804 = vmatpush1.bf16.msra.mxu0 %v799
        %805 = vmatprep.subr.bf16.mxu0 0
        %806 = vmatpush1.bf16.msra.mxu0 0
        %807 = vmatprep.subr.bf16.mxu0 0
        %808 = vmatpush1.bf16.msra.mxu0 0
        %809 = vmatprep.subr.bf16.mxu0 0
        %810 = vmatpush1.bf16.msra.mxu0 0
        %811 = vmatprep.subr.bf16.mxu0 0
        %812 = vmatpush1.bf16.msra.mxu0 0
        %813 = vmatprep.subr.bf16.mxu0 0
        %814 = vmatpush1.bf16.msra.mxu0 0
        %815 = vmatprep.subr.bf16.mxu0 0
        %816 = vmatpush1.bf16.msra.mxu0 0
        %817 = vmatprep.subr.bf16.mxu0 0
        %818 = vmatpush1.bf16.msra.mxu0 0
        %819 = vmatprep.subr.bf16.mxu0 0
        %820 = vmatpush1.bf16.msra.mxu0 0
        %821 = vmatprep.subr.bf16.mxu0 0
        %822 = vmatpush1.bf16.msra.mxu0 0
        %823 = vmatprep.subr.bf16.mxu0 0
        %824 = vmatpush1.bf16.msra.mxu0 0
        %825 = vmatprep.subr.bf16.mxu0 0
        %826 = vmatpush1.bf16.msra.mxu0 0
        %827 = vmatprep.subr.bf16.mxu0 0
        %828 = vmatpush1.bf16.msra.mxu0 0
        %829 = vmatprep.subr.bf16.mxu0 0
        %830 = vmatpush1.bf16.msra.mxu0 0
        %831 = vmatprep.subr.bf16.mxu0 0
        %832 = vmatpush1.bf16.msra.mxu0 0
        %833 = vmatprep.subr.bf16.mxu0 0
        %834 = vmatpush1.bf16.msra.mxu0 0
        %835 = vmatprep.mubr.bf16.mxu0 0
        %836 = vmatmul.mubr.bf16.gmra.mrb[0].mxu0 %v796
        %v837 = vpop.f32.mrb[0].mxu0
        %v838 = vadd.f32 0.0, %v837
        %v839 = vpop.f32.mrb[0].mxu0
        %v840 = vadd.f32 0.0, %v839
        %v841 = vpop.f32.mrb[0].mxu0
        %v842 = vpop.f32.mrb[0].mxu0
        %843 = vdwg.mxu0
        %v845 = vsel %vm794, %v507, 0
        %v847 = vsel %vm798, %v491, 0
        %v849 = vsel %vm798, %v506, 0
        %851 = vmatprep.subr.bf16.mxu0 %v849
        %852 = vmatpush1.bf16.msra.mxu0 %v847
        %853 = vmatprep.subr.bf16.mxu0 0
        %854 = vmatpush1.bf16.msra.mxu0 0
        %855 = vmatprep.subr.bf16.mxu0 0
        %856 = vmatpush1.bf16.msra.mxu0 0
        %857 = vmatprep.subr.bf16.mxu0 0
        %858 = vmatpush1.bf16.msra.mxu0 0
        %859 = vmatprep.subr.bf16.mxu0 0
        %860 = vmatpush1.bf16.msra.mxu0 0
        %861 = vmatprep.subr.bf16.mxu0 0
        %862 = vmatpush1.bf16.msra.mxu0 0
        %863 = vmatprep.subr.bf16.mxu0 0
        %864 = vmatpush1.bf16.msra.mxu0 0
        %865 = vmatprep.subr.bf16.mxu0 0
        %866 = vmatpush1.bf16.msra.mxu0 0
        %867 = vmatprep.subr.bf16.mxu0 0
        %868 = vmatpush1.bf16.msra.mxu0 0
        %869 = vmatprep.subr.bf16.mxu0 0
        %870 = vmatpush1.bf16.msra.mxu0 0
        %871 = vmatprep.subr.bf16.mxu0 0
        %872 = vmatpush1.bf16.msra.mxu0 0
        %873 = vmatprep.subr.bf16.mxu0 0
        %874 = vmatpush1.bf16.msra.mxu0 0
        %875 = vmatprep.subr.bf16.mxu0 0
        %876 = vmatpush1.bf16.msra.mxu0 0
        %877 = vmatprep.subr.bf16.mxu0 0
        %878 = vmatpush1.bf16.msra.mxu0 0
        %879 = vmatprep.subr.bf16.mxu0 0
        %880 = vmatpush1.bf16.msra.mxu0 0
        %881 = vmatprep.subr.bf16.mxu0 0
        %882 = vmatpush1.bf16.msra.mxu0 0
        %883 = vmatprep.mubr.bf16.mxu0 0
        %884 = vmatmul.mubr.bf16.gmra.mrb[0].mxu0 %v845
        %v885 = vpop.f32.mrb[0].mxu0
        %v886 = vadd.f32 %v838, %v885
        %v887 = vpop.f32.mrb[0].mxu0
        %v888 = vadd.f32 %v840, %v887
        %v889 = vpop.f32.mrb[0].mxu0
        %v890 = vpop.f32.mrb[0].mxu0
        %891 = vdwg.mxu0
        %892 = vrot.lane.b32.xlu0 %v228, 126
        %v893 = vpop.permute.xlu0 %892
        %894 = vrot.lane.b32.xlu0 %v229, 126
        %v895 = vpop.permute.xlu0 %894
        %896 = vrot.lane.b32.xlu0 %v231, 126
        %v897 = vpop.permute.xlu0 %896
        %898 = vrot.lane.b32.xlu0 %v232, 126
        %v899 = vpop.permute.xlu0 %898
        %900 = vrot.lane.b32.xlu0 %v234, 126
        %v901 = vpop.permute.xlu0 %900
        %902 = vrot.lane.b32.xlu0 %v235, 126
        %v903 = vpop.permute.xlu0 %902
        %904 = vrot.lane.b32.xlu0 %v237, 126
        %v905 = vpop.permute.xlu0 %904
        %906 = vrot.lane.b32.xlu0 %v238, 126
        %v907 = vpop.permute.xlu0 %906
        %v910 = vpack.i.b16 %v897, %v893
        %v911 = vshrl.u32 %v893, 16
        %v912 = vshrl.u32 %v897, 16
        %v913 = vpack.i.b16 %v912, %v911
        %v916 = vpack.i.b16 %v905, %v901
        %v917 = vshrl.u32 %v901, 16
        %v918 = vshrl.u32 %v905, 16
        %v919 = vpack.i.b16 %v918, %v917
        %v922 = vpack.i.b16 %v899, %v895
        %v923 = vshrl.u32 %v895, 16
        %v924 = vshrl.u32 %v899, 16
        %v925 = vpack.i.b16 %v924, %v923
        %v928 = vpack.i.b16 %v907, %v903
        %v929 = vshrl.u32 %v903, 16
        %v930 = vshrl.u32 %v907, 16
        %v931 = vpack.i.b16 %v930, %v929
        %v934 = vunpack.c.l.s4 1983009808
        %v935 = vunpack.c.0.s8 %v934
        %v936 = vlaneseq
        %v937 = vshrl.u32 %v936, 7
        %v938 = vsub.s32 %v935, %v937
        %v939 = vrot.slane %v910, %v938
        %v942 = vunpack.c.l.s4 1983009808
        %v943 = vunpack.c.0.s8 %v942
        %v944 = vlaneseq
        %v945 = vshrl.u32 %v944, 7
        %v946 = vsub.s32 %v943, %v945
        %v947 = vrot.slane %v916, %v946
        %v948 = vcombine.low %v939, %v947
        %v949 = vcombine.high %v939, %v947
        %v951 = vunpack.c.l.s4 1934713408
        %v952 = vunpack.c.0.s8 %v951
        %v953 = vlaneseq
        %v954 = vshrl.u32 %v953, 7
        %v955 = vsub.s32 %v952, %v954
        %v956 = vrot.slane %v948, %v955
        %v958 = vunpack.c.l.s4 1934713408
        %v959 = vunpack.c.0.s8 %v958
        %v960 = vlaneseq
        %v961 = vshrl.u32 %v960, 7
        %v962 = vsub.s32 %v959, %v961
        %v963 = vrot.slane %v949, %v962
        %v964 = vcombine.high %v956, 0
        %v965 = vcombine.high %v963, 0
        %v968 = vunpack.c.l.s4 1983009808
        %v969 = vunpack.c.0.s8 %v968
        %v970 = vlaneseq
        %v971 = vshrl.u32 %v970, 7
        %v972 = vsub.s32 %v969, %v971
        %v973 = vrot.slane %v913, %v972
        %v976 = vunpack.c.l.s4 1983009808
        %v977 = vunpack.c.0.s8 %v976
        %v978 = vlaneseq
        %v979 = vshrl.u32 %v978, 7
        %v980 = vsub.s32 %v977, %v979
        %v981 = vrot.slane %v919, %v980
        %v982 = vcombine.low %v973, %v981
        %v983 = vcombine.high %v973, %v981
        %v985 = vunpack.c.l.s4 1934713408
        %v986 = vunpack.c.0.s8 %v985
        %v987 = vlaneseq
        %v988 = vshrl.u32 %v987, 7
        %v989 = vsub.s32 %v986, %v988
        %v990 = vrot.slane %v982, %v989
        %v992 = vunpack.c.l.s4 1934713408
        %v993 = vunpack.c.0.s8 %v992
        %v994 = vlaneseq
        %v995 = vshrl.u32 %v994, 7
        %v996 = vsub.s32 %v993, %v995
        %v997 = vrot.slane %v983, %v996
        %v998 = vcombine.high %v990, 0
        %v999 = vcombine.high %v997, 0
        %v1002 = vunpack.c.l.s4 1983009808
        %v1003 = vunpack.c.0.s8 %v1002
        %v1004 = vlaneseq
        %v1005 = vshrl.u32 %v1004, 7
        %v1006 = vsub.s32 %v1003, %v1005
        %v1007 = vrot.slane %v922, %v1006
        %v1010 = vunpack.c.l.s4 1983009808
        %v1011 = vunpack.c.0.s8 %v1010
        %v1012 = vlaneseq
        %v1013 = vshrl.u32 %v1012, 7
        %v1014 = vsub.s32 %v1011, %v1013
        %v1015 = vrot.slane %v928, %v1014
        %v1016 = vcombine.low %v1007, %v1015
        %v1017 = vcombine.high %v1007, %v1015
        %v1019 = vunpack.c.l.s4 1934713408
        %v1020 = vunpack.c.0.s8 %v1019
        %v1021 = vlaneseq
        %v1022 = vshrl.u32 %v1021, 7
        %v1023 = vsub.s32 %v1020, %v1022
        %v1024 = vrot.slane %v1016, %v1023
        %v1026 = vunpack.c.l.s4 1934713408
        %v1027 = vunpack.c.0.s8 %v1026
        %v1028 = vlaneseq
        %v1029 = vshrl.u32 %v1028, 7
        %v1030 = vsub.s32 %v1027, %v1029
        %v1031 = vrot.slane %v1017, %v1030
        %v1032 = vcombine.high %v1024, 0
        %v1033 = vcombine.high %v1031, 0
        %v1036 = vunpack.c.l.s4 1983009808
        %v1037 = vunpack.c.0.s8 %v1036
        %v1038 = vlaneseq
        %v1039 = vshrl.u32 %v1038, 7
        %v1040 = vsub.s32 %v1037, %v1039
        %v1041 = vrot.slane %v925, %v1040
        %v1044 = vunpack.c.l.s4 1983009808
        %v1045 = vunpack.c.0.s8 %v1044
        %v1046 = vlaneseq
        %v1047 = vshrl.u32 %v1046, 7
        %v1048 = vsub.s32 %v1045, %v1047
        %v1049 = vrot.slane %v931, %v1048
        %v1050 = vcombine.low %v1041, %v1049
        %v1051 = vcombine.high %v1041, %v1049
        %v1053 = vunpack.c.l.s4 1934713408
        %v1054 = vunpack.c.0.s8 %v1053
        %v1055 = vlaneseq
        %v1056 = vshrl.u32 %v1055, 7
        %v1057 = vsub.s32 %v1054, %v1056
        %v1058 = vrot.slane %v1050, %v1057
        %v1060 = vunpack.c.l.s4 1934713408
        %v1061 = vunpack.c.0.s8 %v1060
        %v1062 = vlaneseq
        %v1063 = vshrl.u32 %v1062, 7
        %v1064 = vsub.s32 %v1061, %v1063
        %v1065 = vrot.slane %v1051, %v1064
        %v1066 = vcombine.high %v1058, 0
        %v1067 = vcombine.high %v1065, 0
        %v1069 = vunpack.c.l.b16 %v990
        %v1070 = vpack.c.b16 %v1069, %v1069
        %1071 = vrot.lane.b32.xlu0 %v1070, 16
        %v1072 = vpop.permute.xlu0 %1071
        %v1074 = vunpack.c.l.b16 %v964
        %v1075 = vpack.c.b16 %v1074, %v1074
        %1076 = vrot.lane.b32.xlu0 %v1075, 32
        %v1077 = vpop.permute.xlu0 %1076
        %v1079 = vunpack.c.l.b16 %v998
        %v1080 = vpack.c.b16 %v1079, %v1079
        %1081 = vrot.lane.b32.xlu0 %v1080, 48
        %v1082 = vpop.permute.xlu0 %1081
        %v1084 = vunpack.c.l.b16 %v963
        %v1085 = vpack.c.b16 %v1084, %v1084
        %1086 = vrot.lane.b32.xlu0 %v1085, 64
        %v1087 = vpop.permute.xlu0 %1086
        %v1089 = vunpack.c.l.b16 %v997
        %v1090 = vpack.c.b16 %v1089, %v1089
        %1091 = vrot.lane.b32.xlu0 %v1090, 80
        %v1092 = vpop.permute.xlu0 %1091
        %v1094 = vunpack.c.l.b16 %v965
        %v1095 = vpack.c.b16 %v1094, %v1094
        %1096 = vrot.lane.b32.xlu0 %v1095, 96
        %v1097 = vpop.permute.xlu0 %1096
        %v1099 = vunpack.c.l.b16 %v999
        %v1100 = vpack.c.b16 %v1099, %v1099
        %1101 = vrot.lane.b32.xlu0 %v1100, 112
        %v1102 = vpop.permute.xlu0 %1101
        %v1104 = vunpack.c.l.b16 %v1058
        %v1105 = vpack.c.b16 %v1104, %v1104
        %1106 = vrot.lane.b32.xlu0 %v1105, 16
        %v1107 = vpop.permute.xlu0 %1106
        %v1109 = vunpack.c.l.b16 %v1032
        %v1110 = vpack.c.b16 %v1109, %v1109
        %1111 = vrot.lane.b32.xlu0 %v1110, 32
        %v1112 = vpop.permute.xlu0 %1111
        %v1114 = vunpack.c.l.b16 %v1066
        %v1115 = vpack.c.b16 %v1114, %v1114
        %1116 = vrot.lane.b32.xlu0 %v1115, 48
        %v1117 = vpop.permute.xlu0 %1116
        %v1119 = vunpack.c.l.b16 %v1031
        %v1120 = vpack.c.b16 %v1119, %v1119
        %1121 = vrot.lane.b32.xlu0 %v1120, 64
        %v1122 = vpop.permute.xlu0 %1121
        %v1124 = vunpack.c.l.b16 %v1065
        %v1125 = vpack.c.b16 %v1124, %v1124
        %1126 = vrot.lane.b32.xlu0 %v1125, 80
        %v1127 = vpop.permute.xlu0 %1126
        %v1129 = vunpack.c.l.b16 %v1033
        %v1130 = vpack.c.b16 %v1129, %v1129
        %1131 = vrot.lane.b32.xlu0 %v1130, 96
        %v1132 = vpop.permute.xlu0 %1131
        %v1134 = vunpack.c.l.b16 %v1067
        %v1135 = vpack.c.b16 %v1134, %v1134
        %1136 = vrot.lane.b32.xlu0 %v1135, 112
        %v1137 = vpop.permute.xlu0 %1136
        %v1140 = vsel %vm470, %v956, %v1072
        %v1142 = vsel %vm474, %v1140, %v1077
        %v1144 = vsel %vm477, %v1142, %v1082
        %v1146 = vsel %vm480, %v1144, %v1087
        %v1148 = vsel %vm483, %v1146, %v1092
        %v1150 = vsel %vm486, %v1148, %v1097
        %v1152 = vsel %vm489, %v1150, %v1102
        %v1155 = vsel %vm470, %v1024, %v1107
        %v1157 = vsel %vm474, %v1155, %v1112
        %v1159 = vsel %vm477, %v1157, %v1117
        %v1161 = vsel %vm480, %v1159, %v1122
        %v1163 = vsel %vm483, %v1161, %v1127
        %v1165 = vsel %vm486, %v1163, %v1132
        %v1167 = vsel %vm489, %v1165, %v1137
        %s1168 = scalar_lea.vmem %s2, 8
        %v1169 = vld [vmem:[%s1168] sm:$0xf]
        %v1171 = vsel %vm794, %v1169, 0
        %v1173 = vsel %vm798, %v1152, 0
        %v1175 = vsel %vm798, %v1167, 0
        %1177 = vmatprep.subr.bf16.mxu0 %v1175
        %1178 = vmatpush1.bf16.msra.mxu0 %v1173
        %1179 = vmatprep.subr.bf16.mxu0 0
        %1180 = vmatpush1.bf16.msra.mxu0 0
        %1181 = vmatprep.subr.bf16.mxu0 0
        %1182 = vmatpush1.bf16.msra.mxu0 0
        %1183 = vmatprep.subr.bf16.mxu0 0
        %1184 = vmatpush1.bf16.msra.mxu0 0
        %1185 = vmatprep.subr.bf16.mxu0 0
        %1186 = vmatpush1.bf16.msra.mxu0 0
        %1187 = vmatprep.subr.bf16.mxu0 0
        %1188 = vmatpush1.bf16.msra.mxu0 0
        %1189 = vmatprep.subr.bf16.mxu0 0
        %1190 = vmatpush1.bf16.msra.mxu0 0
        %1191 = vmatprep.subr.bf16.mxu0 0
        %1192 = vmatpush1.bf16.msra.mxu0 0
        %1193 = vmatprep.subr.bf16.mxu0 0
        %1194 = vmatpush1.bf16.msra.mxu0 0
        %1195 = vmatprep.subr.bf16.mxu0 0
        %1196 = vmatpush1.bf16.msra.mxu0 0
        %1197 = vmatprep.subr.bf16.mxu0 0
        %1198 = vmatpush1.bf16.msra.mxu0 0
        %1199 = vmatprep.subr.bf16.mxu0 0
        %1200 = vmatpush1.bf16.msra.mxu0 0
        %1201 = vmatprep.subr.bf16.mxu0 0
        %1202 = vmatpush1.bf16.msra.mxu0 0
        %1203 = vmatprep.subr.bf16.mxu0 0
        %1204 = vmatpush1.bf16.msra.mxu0 0
        %1205 = vmatprep.subr.bf16.mxu0 0
        %1206 = vmatpush1.bf16.msra.mxu0 0
        %1207 = vmatprep.subr.bf16.mxu0 0
        %1208 = vmatpush1.bf16.msra.mxu0 0
        %1209 = vmatprep.mubr.bf16.mxu0 0
        %1210 = vmatmul.mubr.bf16.gmra.mrb[0].mxu0 %v1171
        %v1211 = vpop.f32.mrb[0].mxu0
        %v1212 = vadd.f32 0.0, %v1211
        %v1213 = vpop.f32.mrb[0].mxu0
        %v1214 = vadd.f32 0.0, %v1213
        %v1215 = vpop.f32.mrb[0].mxu0
        %v1216 = vpop.f32.mrb[0].mxu0
        %1217 = vdwg.mxu0
        %v1218 = vadd.f32 %v886, %v1212
        %v1219 = vadd.f32 %v888, %v1214
        %vm1220 = vsmask.f32 3328
        %vm1221 = vsmask.f32 7440
        %vm1222 = vmor %vm1220, %vm1221
        %v1224 = vrot.slane %v243, 4
        %v1225 = vshll.u32 %v228, 16
        %v1227 = vrot.slane %v1225, 5
        %v1228 = vor.u32 %v1224, %v1227
        %v1229 = vrot.slane %v1228, 4
        %v1230 = vshll.u32 %v229, 16
        %v1232 = vrot.slane %v1230, 5
        %v1233 = vsel %vm1222, %v1229, %v1232
        %v1235 = vrot.slane %v255, 4
        %v1236 = vor.u32 %v1235, %v1232
        %v1237 = vrot.slane %v1236, 4
        %v1239 = vshll.u32 %v230, 16
        %v1241 = vrot.slane %v1239, 5
        %v1242 = vsel %vm1222, %v1237, %v1241
        %v1244 = vrot.slane %v244, 4
        %v1245 = vshll.u32 %v231, 16
        %v1247 = vrot.slane %v1245, 5
        %v1248 = vor.u32 %v1244, %v1247
        %v1249 = vrot.slane %v1248, 4
        %v1250 = vshll.u32 %v232, 16
        %v1252 = vrot.slane %v1250, 5
        %v1253 = vsel %vm1222, %v1249, %v1252
        %v1255 = vrot.slane %v256, 4
        %v1256 = vor.u32 %v1255, %v1252
        %v1257 = vrot.slane %v1256, 4
        %v1259 = vshll.u32 %v233, 16
        %v1261 = vrot.slane %v1259, 5
        %v1262 = vsel %vm1222, %v1257, %v1261
        %v1264 = vrot.slane %v249, 4
        %v1265 = vshll.u32 %v234, 16
        %v1267 = vrot.slane %v1265, 5
        %v1268 = vor.u32 %v1264, %v1267
        %v1269 = vrot.slane %v1268, 4
        %v1270 = vshll.u32 %v235, 16
        %v1272 = vrot.slane %v1270, 5
        %v1273 = vsel %vm1222, %v1269, %v1272
        %v1275 = vrot.slane %v261, 4
        %v1276 = vor.u32 %v1275, %v1272
        %v1277 = vrot.slane %v1276, 4
        %v1279 = vshll.u32 %v236, 16
        %v1281 = vrot.slane %v1279, 5
        %v1282 = vsel %vm1222, %v1277, %v1281
        %v1284 = vrot.slane %v250, 4
        %v1285 = vshll.u32 %v237, 16
        %v1287 = vrot.slane %v1285, 5
        %v1288 = vor.u32 %v1284, %v1287
        %v1289 = vrot.slane %v1288, 4
        %v1290 = vshll.u32 %v238, 16
        %v1292 = vrot.slane %v1290, 5
        %v1293 = vsel %vm1222, %v1289, %v1292
        %v1295 = vrot.slane %v262, 4
        %v1296 = vor.u32 %v1295, %v1292
        %v1297 = vrot.slane %v1296, 4
        %v1299 = vshll.u32 %v239, 16
        %v1301 = vrot.slane %v1299, 5
        %v1302 = vsel %vm1222, %v1297, %v1301
        %v1305 = vpack.i.b16 %v1253, %v1233
        %v1306 = vshrl.u32 %v1233, 16
        %v1307 = vshrl.u32 %v1253, 16
        %v1308 = vpack.i.b16 %v1307, %v1306
        %v1311 = vpack.i.b16 %v1293, %v1273
        %v1312 = vshrl.u32 %v1273, 16
        %v1313 = vshrl.u32 %v1293, 16
        %v1314 = vpack.i.b16 %v1313, %v1312
        %v1317 = vpack.i.b16 %v1262, %v1242
        %v1318 = vshrl.u32 %v1242, 16
        %v1319 = vshrl.u32 %v1262, 16
        %v1320 = vpack.i.b16 %v1319, %v1318
        %v1323 = vpack.i.b16 %v1302, %v1282
        %v1324 = vshrl.u32 %v1282, 16
        %v1325 = vshrl.u32 %v1302, 16
        %v1326 = vpack.i.b16 %v1325, %v1324
        %v1329 = vunpack.c.l.s4 1983009808
        %v1330 = vunpack.c.0.s8 %v1329
        %v1331 = vlaneseq
        %v1332 = vshrl.u32 %v1331, 7
        %v1333 = vsub.s32 %v1330, %v1332
        %v1334 = vrot.slane %v1305, %v1333
        %v1337 = vunpack.c.l.s4 1983009808
        %v1338 = vunpack.c.0.s8 %v1337
        %v1339 = vlaneseq
        %v1340 = vshrl.u32 %v1339, 7
        %v1341 = vsub.s32 %v1338, %v1340
        %v1342 = vrot.slane %v1311, %v1341
        %v1343 = vcombine.low %v1334, %v1342
        %v1344 = vcombine.high %v1334, %v1342
        %v1346 = vunpack.c.l.s4 1934713408
        %v1347 = vunpack.c.0.s8 %v1346
        %v1348 = vlaneseq
        %v1349 = vshrl.u32 %v1348, 7
        %v1350 = vsub.s32 %v1347, %v1349
        %v1351 = vrot.slane %v1343, %v1350
        %v1353 = vunpack.c.l.s4 1934713408
        %v1354 = vunpack.c.0.s8 %v1353
        %v1355 = vlaneseq
        %v1356 = vshrl.u32 %v1355, 7
        %v1357 = vsub.s32 %v1354, %v1356
        %v1358 = vrot.slane %v1344, %v1357
        %v1359 = vcombine.high %v1351, 0
        %v1360 = vcombine.high %v1358, 0
        %v1363 = vunpack.c.l.s4 1983009808
        %v1364 = vunpack.c.0.s8 %v1363
        %v1365 = vlaneseq
        %v1366 = vshrl.u32 %v1365, 7
        %v1367 = vsub.s32 %v1364, %v1366
        %v1368 = vrot.slane %v1308, %v1367
        %v1371 = vunpack.c.l.s4 1983009808
        %v1372 = vunpack.c.0.s8 %v1371
        %v1373 = vlaneseq
        %v1374 = vshrl.u32 %v1373, 7
        %v1375 = vsub.s32 %v1372, %v1374
        %v1376 = vrot.slane %v1314, %v1375
        %v1377 = vcombine.low %v1368, %v1376
        %v1378 = vcombine.high %v1368, %v1376
        %v1380 = vunpack.c.l.s4 1934713408
        %v1381 = vunpack.c.0.s8 %v1380
        %v1382 = vlaneseq
        %v1383 = vshrl.u32 %v1382, 7
        %v1384 = vsub.s32 %v1381, %v1383
        %v1385 = vrot.slane %v1377, %v1384
        %v1387 = vunpack.c.l.s4 1934713408
        %v1388 = vunpack.c.0.s8 %v1387
        %v1389 = vlaneseq
        %v1390 = vshrl.u32 %v1389, 7
        %v1391 = vsub.s32 %v1388, %v1390
        %v1392 = vrot.slane %v1378, %v1391
        %v1393 = vcombine.high %v1385, 0
        %v1394 = vcombine.high %v1392, 0
        %v1397 = vunpack.c.l.s4 1983009808
        %v1398 = vunpack.c.0.s8 %v1397
        %v1399 = vlaneseq
        %v1400 = vshrl.u32 %v1399, 7
        %v1401 = vsub.s32 %v1398, %v1400
        %v1402 = vrot.slane %v1317, %v1401
        %v1405 = vunpack.c.l.s4 1983009808
        %v1406 = vunpack.c.0.s8 %v1405
        %v1407 = vlaneseq
        %v1408 = vshrl.u32 %v1407, 7
        %v1409 = vsub.s32 %v1406, %v1408
        %v1410 = vrot.slane %v1323, %v1409
        %v1411 = vcombine.low %v1402, %v1410
        %v1412 = vcombine.high %v1402, %v1410
        %v1414 = vunpack.c.l.s4 1934713408
        %v1415 = vunpack.c.0.s8 %v1414
        %v1416 = vlaneseq
        %v1417 = vshrl.u32 %v1416, 7
        %v1418 = vsub.s32 %v1415, %v1417
        %v1419 = vrot.slane %v1411, %v1418
        %v1421 = vunpack.c.l.s4 1934713408
        %v1422 = vunpack.c.0.s8 %v1421
        %v1423 = vlaneseq
        %v1424 = vshrl.u32 %v1423, 7
        %v1425 = vsub.s32 %v1422, %v1424
        %v1426 = vrot.slane %v1412, %v1425
        %v1427 = vcombine.high %v1419, 0
        %v1428 = vcombine.high %v1426, 0
        %v1431 = vunpack.c.l.s4 1983009808
        %v1432 = vunpack.c.0.s8 %v1431
        %v1433 = vlaneseq
        %v1434 = vshrl.u32 %v1433, 7
        %v1435 = vsub.s32 %v1432, %v1434
        %v1436 = vrot.slane %v1320, %v1435
        %v1439 = vunpack.c.l.s4 1983009808
        %v1440 = vunpack.c.0.s8 %v1439
        %v1441 = vlaneseq
        %v1442 = vshrl.u32 %v1441, 7
        %v1443 = vsub.s32 %v1440, %v1442
        %v1444 = vrot.slane %v1326, %v1443
        %v1445 = vcombine.low %v1436, %v1444
        %v1446 = vcombine.high %v1436, %v1444
        %v1448 = vunpack.c.l.s4 1934713408
        %v1449 = vunpack.c.0.s8 %v1448
        %v1450 = vlaneseq
        %v1451 = vshrl.u32 %v1450, 7
        %v1452 = vsub.s32 %v1449, %v1451
        %v1453 = vrot.slane %v1445, %v1452
        %v1455 = vunpack.c.l.s4 1934713408
        %v1456 = vunpack.c.0.s8 %v1455
        %v1457 = vlaneseq
        %v1458 = vshrl.u32 %v1457, 7
        %v1459 = vsub.s32 %v1456, %v1458
        %v1460 = vrot.slane %v1446, %v1459
        %v1461 = vcombine.high %v1453, 0
        %v1462 = vcombine.high %v1460, 0
        %v1464 = vunpack.c.l.b16 %v1385
        %v1465 = vpack.c.b16 %v1464, %v1464
        %1466 = vrot.lane.b32.xlu0 %v1465, 16
        %v1467 = vpop.permute.xlu0 %1466
        %v1469 = vunpack.c.l.b16 %v1359
        %v1470 = vpack.c.b16 %v1469, %v1469
        %1471 = vrot.lane.b32.xlu0 %v1470, 32
        %v1472 = vpop.permute.xlu0 %1471
        %v1474 = vunpack.c.l.b16 %v1393
        %v1475 = vpack.c.b16 %v1474, %v1474
        %1476 = vrot.lane.b32.xlu0 %v1475, 48
        %v1477 = vpop.permute.xlu0 %1476
        %v1479 = vunpack.c.l.b16 %v1358
        %v1480 = vpack.c.b16 %v1479, %v1479
        %1481 = vrot.lane.b32.xlu0 %v1480, 64
        %v1482 = vpop.permute.xlu0 %1481
        %v1484 = vunpack.c.l.b16 %v1392
        %v1485 = vpack.c.b16 %v1484, %v1484
        %1486 = vrot.lane.b32.xlu0 %v1485, 80
        %v1487 = vpop.permute.xlu0 %1486
        %v1489 = vunpack.c.l.b16 %v1360
        %v1490 = vpack.c.b16 %v1489, %v1489
        %1491 = vrot.lane.b32.xlu0 %v1490, 96
        %v1492 = vpop.permute.xlu0 %1491
        %v1494 = vunpack.c.l.b16 %v1394
        %v1495 = vpack.c.b16 %v1494, %v1494
        %1496 = vrot.lane.b32.xlu0 %v1495, 112
        %v1497 = vpop.permute.xlu0 %1496
        %v1499 = vunpack.c.l.b16 %v1453
        %v1500 = vpack.c.b16 %v1499, %v1499
        %1501 = vrot.lane.b32.xlu0 %v1500, 16
        %v1502 = vpop.permute.xlu0 %1501
        %v1504 = vunpack.c.l.b16 %v1427
        %v1505 = vpack.c.b16 %v1504, %v1504
        %1506 = vrot.lane.b32.xlu0 %v1505, 32
        %v1507 = vpop.permute.xlu0 %1506
        %v1509 = vunpack.c.l.b16 %v1461
        %v1510 = vpack.c.b16 %v1509, %v1509
        %1511 = vrot.lane.b32.xlu0 %v1510, 48
        %v1512 = vpop.permute.xlu0 %1511
        %v1514 = vunpack.c.l.b16 %v1426
        %v1515 = vpack.c.b16 %v1514, %v1514
        %1516 = vrot.lane.b32.xlu0 %v1515, 64
        %v1517 = vpop.permute.xlu0 %1516
        %v1519 = vunpack.c.l.b16 %v1460
        %v1520 = vpack.c.b16 %v1519, %v1519
        %1521 = vrot.lane.b32.xlu0 %v1520, 80
        %v1522 = vpop.permute.xlu0 %1521
        %v1524 = vunpack.c.l.b16 %v1428
        %v1525 = vpack.c.b16 %v1524, %v1524
        %1526 = vrot.lane.b32.xlu0 %v1525, 96
        %v1527 = vpop.permute.xlu0 %1526
        %v1529 = vunpack.c.l.b16 %v1462
        %v1530 = vpack.c.b16 %v1529, %v1529
        %1531 = vrot.lane.b32.xlu0 %v1530, 112
        %v1532 = vpop.permute.xlu0 %1531
        %v1535 = vsel %vm470, %v1351, %v1467
        %v1537 = vsel %vm474, %v1535, %v1472
        %v1539 = vsel %vm477, %v1537, %v1477
        %v1541 = vsel %vm480, %v1539, %v1482
        %v1543 = vsel %vm483, %v1541, %v1487
        %v1545 = vsel %vm486, %v1543, %v1492
        %v1547 = vsel %vm489, %v1545, %v1497
        %v1550 = vsel %vm470, %v1419, %v1502
        %v1552 = vsel %vm474, %v1550, %v1507
        %v1554 = vsel %vm477, %v1552, %v1512
        %v1556 = vsel %vm480, %v1554, %v1517
        %v1558 = vsel %vm483, %v1556, %v1522
        %v1560 = vsel %vm486, %v1558, %v1527
        %v1562 = vsel %vm489, %v1560, %v1532
        %s1563 = scalar_lea.vmem %s2, 12
        %v1564 = vld [vmem:[%s1563] sm:$0xf]
        %v1566 = vsel %vm794, %v1564, 0
        %v1568 = vsel %vm798, %v1547, 0
        %v1570 = vsel %vm798, %v1562, 0
        %1572 = vmatprep.subr.bf16.mxu0 %v1570
        %1573 = vmatpush1.bf16.msra.mxu0 %v1568
        %1574 = vmatprep.subr.bf16.mxu0 0
        %1575 = vmatpush1.bf16.msra.mxu0 0
        %1576 = vmatprep.subr.bf16.mxu0 0
        %1577 = vmatpush1.bf16.msra.mxu0 0
        %1578 = vmatprep.subr.bf16.mxu0 0
        %1579 = vmatpush1.bf16.msra.mxu0 0
        %1580 = vmatprep.subr.bf16.mxu0 0
        %1581 = vmatpush1.bf16.msra.mxu0 0
        %1582 = vmatprep.subr.bf16.mxu0 0
        %1583 = vmatpush1.bf16.msra.mxu0 0
        %1584 = vmatprep.subr.bf16.mxu0 0
        %1585 = vmatpush1.bf16.msra.mxu0 0
        %1586 = vmatprep.subr.bf16.mxu0 0
        %1587 = vmatpush1.bf16.msra.mxu0 0
        %1588 = vmatprep.subr.bf16.mxu0 0
        %1589 = vmatpush1.bf16.msra.mxu0 0
        %1590 = vmatprep.subr.bf16.mxu0 0
        %1591 = vmatpush1.bf16.msra.mxu0 0
        %1592 = vmatprep.subr.bf16.mxu0 0
        %1593 = vmatpush1.bf16.msra.mxu0 0
        %1594 = vmatprep.subr.bf16.mxu0 0
        %1595 = vmatpush1.bf16.msra.mxu0 0
        %1596 = vmatprep.subr.bf16.mxu0 0
        %1597 = vmatpush1.bf16.msra.mxu0 0
        %1598 = vmatprep.subr.bf16.mxu0 0
        %1599 = vmatpush1.bf16.msra.mxu0 0
        %1600 = vmatprep.subr.bf16.mxu0 0
        %1601 = vmatpush1.bf16.msra.mxu0 0
        %1602 = vmatprep.subr.bf16.mxu0 0
        %1603 = vmatpush1.bf16.msra.mxu0 0
        %1604 = vmatprep.mubr.bf16.mxu0 0
        %1605 = vmatmul.mubr.bf16.gmra.mrb[0].mxu0 %v1566
        %v1606 = vpop.f32.mrb[0].mxu0
        %v1607 = vadd.f32 0.0, %v1606
        %v1608 = vpop.f32.mrb[0].mxu0
        %v1609 = vadd.f32 0.0, %v1608
        %v1610 = vpop.f32.mrb[0].mxu0
        %v1611 = vpop.f32.mrb[0].mxu0
        %1612 = vdwg.mxu0
        %v1613 = vadd.f32 %v1218, %v1607
        %v1614 = vadd.f32 %v1219, %v1609
        %1615 = vrot.lane.b32.xlu0 %v1233, 127
        %v1616 = vpop.permute.xlu0 %1615
        %1617 = vrot.lane.b32.xlu0 %v1242, 127
        %v1618 = vpop.permute.xlu0 %1617
        %1619 = vrot.lane.b32.xlu0 %v1253, 127
        %v1620 = vpop.permute.xlu0 %1619
        %1621 = vrot.lane.b32.xlu0 %v1262, 127
        %v1622 = vpop.permute.xlu0 %1621
        %1623 = vrot.lane.b32.xlu0 %v1273, 127
        %v1624 = vpop.permute.xlu0 %1623
        %1625 = vrot.lane.b32.xlu0 %v1282, 127
        %v1626 = vpop.permute.xlu0 %1625
        %1627 = vrot.lane.b32.xlu0 %v1293, 127
        %v1628 = vpop.permute.xlu0 %1627
        %1629 = vrot.lane.b32.xlu0 %v1302, 127
        %v1630 = vpop.permute.xlu0 %1629
        %v1633 = vpack.i.b16 %v1620, %v1616
        %v1634 = vshrl.u32 %v1616, 16
        %v1635 = vshrl.u32 %v1620, 16
        %v1636 = vpack.i.b16 %v1635, %v1634
        %v1639 = vpack.i.b16 %v1628, %v1624
        %v1640 = vshrl.u32 %v1624, 16
        %v1641 = vshrl.u32 %v1628, 16
        %v1642 = vpack.i.b16 %v1641, %v1640
        %v1645 = vpack.i.b16 %v1622, %v1618
        %v1646 = vshrl.u32 %v1618, 16
        %v1647 = vshrl.u32 %v1622, 16
        %v1648 = vpack.i.b16 %v1647, %v1646
        %v1651 = vpack.i.b16 %v1630, %v1626
        %v1652 = vshrl.u32 %v1626, 16
        %v1653 = vshrl.u32 %v1630, 16
        %v1654 = vpack.i.b16 %v1653, %v1652
        %v1657 = vunpack.c.l.s4 1983009808
        %v1658 = vunpack.c.0.s8 %v1657
        %v1659 = vlaneseq
        %v1660 = vshrl.u32 %v1659, 7
        %v1661 = vsub.s32 %v1658, %v1660
        %v1662 = vrot.slane %v1633, %v1661
        %v1665 = vunpack.c.l.s4 1983009808
        %v1666 = vunpack.c.0.s8 %v1665
        %v1667 = vlaneseq
        %v1668 = vshrl.u32 %v1667, 7
        %v1669 = vsub.s32 %v1666, %v1668
        %v1670 = vrot.slane %v1639, %v1669
        %v1671 = vcombine.low %v1662, %v1670
        %v1672 = vcombine.high %v1662, %v1670
        %v1674 = vunpack.c.l.s4 1934713408
        %v1675 = vunpack.c.0.s8 %v1674
        %v1676 = vlaneseq
        %v1677 = vshrl.u32 %v1676, 7
        %v1678 = vsub.s32 %v1675, %v1677
        %v1679 = vrot.slane %v1671, %v1678
        %v1681 = vunpack.c.l.s4 1934713408
        %v1682 = vunpack.c.0.s8 %v1681
        %v1683 = vlaneseq
        %v1684 = vshrl.u32 %v1683, 7
        %v1685 = vsub.s32 %v1682, %v1684
        %v1686 = vrot.slane %v1672, %v1685
        %v1687 = vcombine.high %v1679, 0
        %v1688 = vcombine.high %v1686, 0
        %v1691 = vunpack.c.l.s4 1983009808
        %v1692 = vunpack.c.0.s8 %v1691
        %v1693 = vlaneseq
        %v1694 = vshrl.u32 %v1693, 7
        %v1695 = vsub.s32 %v1692, %v1694
        %v1696 = vrot.slane %v1636, %v1695
        %v1699 = vunpack.c.l.s4 1983009808
        %v1700 = vunpack.c.0.s8 %v1699
        %v1701 = vlaneseq
        %v1702 = vshrl.u32 %v1701, 7
        %v1703 = vsub.s32 %v1700, %v1702
        %v1704 = vrot.slane %v1642, %v1703
        %v1705 = vcombine.low %v1696, %v1704
        %v1706 = vcombine.high %v1696, %v1704
        %v1708 = vunpack.c.l.s4 1934713408
        %v1709 = vunpack.c.0.s8 %v1708
        %v1710 = vlaneseq
        %v1711 = vshrl.u32 %v1710, 7
        %v1712 = vsub.s32 %v1709, %v1711
        %v1713 = vrot.slane %v1705, %v1712
        %v1715 = vunpack.c.l.s4 1934713408
        %v1716 = vunpack.c.0.s8 %v1715
        %v1717 = vlaneseq
        %v1718 = vshrl.u32 %v1717, 7
        %v1719 = vsub.s32 %v1716, %v1718
        %v1720 = vrot.slane %v1706, %v1719
        %v1721 = vcombine.high %v1713, 0
        %v1722 = vcombine.high %v1720, 0
        %v1725 = vunpack.c.l.s4 1983009808
        %v1726 = vunpack.c.0.s8 %v1725
        %v1727 = vlaneseq
        %v1728 = vshrl.u32 %v1727, 7
        %v1729 = vsub.s32 %v1726, %v1728
        %v1730 = vrot.slane %v1645, %v1729
        %v1733 = vunpack.c.l.s4 1983009808
        %v1734 = vunpack.c.0.s8 %v1733
        %v1735 = vlaneseq
        %v1736 = vshrl.u32 %v1735, 7
        %v1737 = vsub.s32 %v1734, %v1736
        %v1738 = vrot.slane %v1651, %v1737
        %v1739 = vcombine.low %v1730, %v1738
        %v1740 = vcombine.high %v1730, %v1738
        %v1742 = vunpack.c.l.s4 1934713408
        %v1743 = vunpack.c.0.s8 %v1742
        %v1744 = vlaneseq
        %v1745 = vshrl.u32 %v1744, 7
        %v1746 = vsub.s32 %v1743, %v1745
        %v1747 = vrot.slane %v1739, %v1746
        %v1749 = vunpack.c.l.s4 1934713408
        %v1750 = vunpack.c.0.s8 %v1749
        %v1751 = vlaneseq
        %v1752 = vshrl.u32 %v1751, 7
        %v1753 = vsub.s32 %v1750, %v1752
        %v1754 = vrot.slane %v1740, %v1753
        %v1755 = vcombine.high %v1747, 0
        %v1756 = vcombine.high %v1754, 0
        %v1759 = vunpack.c.l.s4 1983009808
        %v1760 = vunpack.c.0.s8 %v1759
        %v1761 = vlaneseq
        %v1762 = vshrl.u32 %v1761, 7
        %v1763 = vsub.s32 %v1760, %v1762
        %v1764 = vrot.slane %v1648, %v1763
        %v1767 = vunpack.c.l.s4 1983009808
        %v1768 = vunpack.c.0.s8 %v1767
        %v1769 = vlaneseq
        %v1770 = vshrl.u32 %v1769, 7
        %v1771 = vsub.s32 %v1768, %v1770
        %v1772 = vrot.slane %v1654, %v1771
        %v1773 = vcombine.low %v1764, %v1772
        %v1774 = vcombine.high %v1764, %v1772
        %v1776 = vunpack.c.l.s4 1934713408
        %v1777 = vunpack.c.0.s8 %v1776
        %v1778 = vlaneseq
        %v1779 = vshrl.u32 %v1778, 7
        %v1780 = vsub.s32 %v1777, %v1779
        %v1781 = vrot.slane %v1773, %v1780
        %v1783 = vunpack.c.l.s4 1934713408
        %v1784 = vunpack.c.0.s8 %v1783
        %v1785 = vlaneseq
        %v1786 = vshrl.u32 %v1785, 7
        %v1787 = vsub.s32 %v1784, %v1786
        %v1788 = vrot.slane %v1774, %v1787
        %v1789 = vcombine.high %v1781, 0
        %v1790 = vcombine.high %v1788, 0
        %v1792 = vunpack.c.l.b16 %v1713
        %v1793 = vpack.c.b16 %v1792, %v1792
        %1794 = vrot.lane.b32.xlu0 %v1793, 16
        %v1795 = vpop.permute.xlu0 %1794
        %v1797 = vunpack.c.l.b16 %v1687
        %v1798 = vpack.c.b16 %v1797, %v1797
        %1799 = vrot.lane.b32.xlu0 %v1798, 32
        %v1800 = vpop.permute.xlu0 %1799
        %v1802 = vunpack.c.l.b16 %v1721
        %v1803 = vpack.c.b16 %v1802, %v1802
        %1804 = vrot.lane.b32.xlu0 %v1803, 48
        %v1805 = vpop.permute.xlu0 %1804
        %v1807 = vunpack.c.l.b16 %v1686
        %v1808 = vpack.c.b16 %v1807, %v1807
        %1809 = vrot.lane.b32.xlu0 %v1808, 64
        %v1810 = vpop.permute.xlu0 %1809
        %v1812 = vunpack.c.l.b16 %v1720
        %v1813 = vpack.c.b16 %v1812, %v1812
        %1814 = vrot.lane.b32.xlu0 %v1813, 80
        %v1815 = vpop.permute.xlu0 %1814
        %v1817 = vunpack.c.l.b16 %v1688
        %v1818 = vpack.c.b16 %v1817, %v1817
        %1819 = vrot.lane.b32.xlu0 %v1818, 96
        %v1820 = vpop.permute.xlu0 %1819
        %v1822 = vunpack.c.l.b16 %v1722
        %v1823 = vpack.c.b16 %v1822, %v1822
        %1824 = vrot.lane.b32.xlu0 %v1823, 112
        %v1825 = vpop.permute.xlu0 %1824
        %v1827 = vunpack.c.l.b16 %v1781
        %v1828 = vpack.c.b16 %v1827, %v1827
        %1829 = vrot.lane.b32.xlu0 %v1828, 16
        %v1830 = vpop.permute.xlu0 %1829
        %v1832 = vunpack.c.l.b16 %v1755
        %v1833 = vpack.c.b16 %v1832, %v1832
        %1834 = vrot.lane.b32.xlu0 %v1833, 32
        %v1835 = vpop.permute.xlu0 %1834
        %v1837 = vunpack.c.l.b16 %v1789
        %v1838 = vpack.c.b16 %v1837, %v1837
        %1839 = vrot.lane.b32.xlu0 %v1838, 48
        %v1840 = vpop.permute.xlu0 %1839
        %v1842 = vunpack.c.l.b16 %v1754
        %v1843 = vpack.c.b16 %v1842, %v1842
        %1844 = vrot.lane.b32.xlu0 %v1843, 64
        %v1845 = vpop.permute.xlu0 %1844
        %v1847 = vunpack.c.l.b16 %v1788
        %v1848 = vpack.c.b16 %v1847, %v1847
        %1849 = vrot.lane.b32.xlu0 %v1848, 80
        %v1850 = vpop.permute.xlu0 %1849
        %v1852 = vunpack.c.l.b16 %v1756
        %v1853 = vpack.c.b16 %v1852, %v1852
        %1854 = vrot.lane.b32.xlu0 %v1853, 96
        %v1855 = vpop.permute.xlu0 %1854
        %v1857 = vunpack.c.l.b16 %v1790
        %v1858 = vpack.c.b16 %v1857, %v1857
        %1859 = vrot.lane.b32.xlu0 %v1858, 112
        %v1860 = vpop.permute.xlu0 %1859
        %v1863 = vsel %vm470, %v1679, %v1795
        %v1865 = vsel %vm474, %v1863, %v1800
        %v1867 = vsel %vm477, %v1865, %v1805
        %v1869 = vsel %vm480, %v1867, %v1810
        %v1871 = vsel %vm483, %v1869, %v1815
        %v1873 = vsel %vm486, %v1871, %v1820
        %v1875 = vsel %vm489, %v1873, %v1825
        %v1878 = vsel %vm470, %v1747, %v1830
        %v1880 = vsel %vm474, %v1878, %v1835
        %v1882 = vsel %vm477, %v1880, %v1840
        %v1884 = vsel %vm480, %v1882, %v1845
        %v1886 = vsel %vm483, %v1884, %v1850
        %v1888 = vsel %vm486, %v1886, %v1855
        %v1890 = vsel %vm489, %v1888, %v1860
        %s1891 = scalar_lea.vmem %s2, 16
        %v1892 = vld [vmem:[%s1891] sm:$0xf]
        %v1894 = vsel %vm794, %v1892, 0
        %v1896 = vsel %vm798, %v1875, 0
        %v1898 = vsel %vm798, %v1890, 0
        %1900 = vmatprep.subr.bf16.mxu0 %v1898
        %1901 = vmatpush1.bf16.msra.mxu0 %v1896
        %1902 = vmatprep.subr.bf16.mxu0 0
        %1903 = vmatpush1.bf16.msra.mxu0 0
        %1904 = vmatprep.subr.bf16.mxu0 0
        %1905 = vmatpush1.bf16.msra.mxu0 0
        %1906 = vmatprep.subr.bf16.mxu0 0
        %1907 = vmatpush1.bf16.msra.mxu0 0
        %1908 = vmatprep.subr.bf16.mxu0 0
        %1909 = vmatpush1.bf16.msra.mxu0 0
        %1910 = vmatprep.subr.bf16.mxu0 0
        %1911 = vmatpush1.bf16.msra.mxu0 0
        %1912 = vmatprep.subr.bf16.mxu0 0
        %1913 = vmatpush1.bf16.msra.mxu0 0
        %1914 = vmatprep.subr.bf16.mxu0 0
        %1915 = vmatpush1.bf16.msra.mxu0 0
        %1916 = vmatprep.subr.bf16.mxu0 0
        %1917 = vmatpush1.bf16.msra.mxu0 0
        %1918 = vmatprep.subr.bf16.mxu0 0
        %1919 = vmatpush1.bf16.msra.mxu0 0
        %1920 = vmatprep.subr.bf16.mxu0 0
        %1921 = vmatpush1.bf16.msra.mxu0 0
        %1922 = vmatprep.subr.bf16.mxu0 0
        %1923 = vmatpush1.bf16.msra.mxu0 0
        %1924 = vmatprep.subr.bf16.mxu0 0
        %1925 = vmatpush1.bf16.msra.mxu0 0
        %1926 = vmatprep.subr.bf16.mxu0 0
        %1927 = vmatpush1.bf16.msra.mxu0 0
        %1928 = vmatprep.subr.bf16.mxu0 0
        %1929 = vmatpush1.bf16.msra.mxu0 0
        %1930 = vmatprep.subr.bf16.mxu0 0
        %1931 = vmatpush1.bf16.msra.mxu0 0
        %1932 = vmatprep.mubr.bf16.mxu0 0
        %1933 = vmatmul.mubr.bf16.gmra.mrb[0].mxu0 %v1894
        %v1934 = vpop.f32.mrb[0].mxu0
        %v1935 = vadd.f32 0.0, %v1934
        %v1936 = vpop.f32.mrb[0].mxu0
        %v1937 = vadd.f32 0.0, %v1936
        %v1938 = vpop.f32.mrb[0].mxu0
        %v1939 = vpop.f32.mrb[0].mxu0
        %1940 = vdwg.mxu0
        %v1941 = vadd.f32 %v1613, %v1935
        %v1942 = vadd.f32 %v1614, %v1937
        %1943 = vrot.lane.b32.xlu0 %v1233, 126
        %v1944 = vpop.permute.xlu0 %1943
        %1945 = vrot.lane.b32.xlu0 %v1242, 126
        %v1946 = vpop.permute.xlu0 %1945
        %1947 = vrot.lane.b32.xlu0 %v1253, 126
        %v1948 = vpop.permute.xlu0 %1947
        %1949 = vrot.lane.b32.xlu0 %v1262, 126
        %v1950 = vpop.permute.xlu0 %1949
        %1951 = vrot.lane.b32.xlu0 %v1273, 126
        %v1952 = vpop.permute.xlu0 %1951
        %1953 = vrot.lane.b32.xlu0 %v1282, 126
        %v1954 = vpop.permute.xlu0 %1953
        %1955 = vrot.lane.b32.xlu0 %v1293, 126
        %v1956 = vpop.permute.xlu0 %1955
        %1957 = vrot.lane.b32.xlu0 %v1302, 126
        %v1958 = vpop.permute.xlu0 %1957
        %v1961 = vpack.i.b16 %v1948, %v1944
        %v1962 = vshrl.u32 %v1944, 16
        %v1963 = vshrl.u32 %v1948, 16
        %v1964 = vpack.i.b16 %v1963, %v1962
        %v1967 = vpack.i.b16 %v1956, %v1952
        %v1968 = vshrl.u32 %v1952, 16
        %v1969 = vshrl.u32 %v1956, 16
        %v1970 = vpack.i.b16 %v1969, %v1968
        %v1973 = vpack.i.b16 %v1950, %v1946
        %v1974 = vshrl.u32 %v1946, 16
        %v1975 = vshrl.u32 %v1950, 16
        %v1976 = vpack.i.b16 %v1975, %v1974
        %v1979 = vpack.i.b16 %v1958, %v1954
        %v1980 = vshrl.u32 %v1954, 16
        %v1981 = vshrl.u32 %v1958, 16
        %v1982 = vpack.i.b16 %v1981, %v1980
        %v1985 = vunpack.c.l.s4 1983009808
        %v1986 = vunpack.c.0.s8 %v1985
        %v1987 = vlaneseq
        %v1988 = vshrl.u32 %v1987, 7
        %v1989 = vsub.s32 %v1986, %v1988
        %v1990 = vrot.slane %v1961, %v1989
        %v1993 = vunpack.c.l.s4 1983009808
        %v1994 = vunpack.c.0.s8 %v1993
        %v1995 = vlaneseq
        %v1996 = vshrl.u32 %v1995, 7
        %v1997 = vsub.s32 %v1994, %v1996
        %v1998 = vrot.slane %v1967, %v1997
        %v1999 = vcombine.low %v1990, %v1998
        %v2000 = vcombine.high %v1990, %v1998
        %v2002 = vunpack.c.l.s4 1934713408
        %v2003 = vunpack.c.0.s8 %v2002
        %v2004 = vlaneseq
        %v2005 = vshrl.u32 %v2004, 7
        %v2006 = vsub.s32 %v2003, %v2005
        %v2007 = vrot.slane %v1999, %v2006
        %v2009 = vunpack.c.l.s4 1934713408
        %v2010 = vunpack.c.0.s8 %v2009
        %v2011 = vlaneseq
        %v2012 = vshrl.u32 %v2011, 7
        %v2013 = vsub.s32 %v2010, %v2012
        %v2014 = vrot.slane %v2000, %v2013
        %v2015 = vcombine.high %v2007, 0
        %v2016 = vcombine.high %v2014, 0
        %v2019 = vunpack.c.l.s4 1983009808
        %v2020 = vunpack.c.0.s8 %v2019
        %v2021 = vlaneseq
        %v2022 = vshrl.u32 %v2021, 7
        %v2023 = vsub.s32 %v2020, %v2022
        %v2024 = vrot.slane %v1964, %v2023
        %v2027 = vunpack.c.l.s4 1983009808
        %v2028 = vunpack.c.0.s8 %v2027
        %v2029 = vlaneseq
        %v2030 = vshrl.u32 %v2029, 7
        %v2031 = vsub.s32 %v2028, %v2030
        %v2032 = vrot.slane %v1970, %v2031
        %v2033 = vcombine.low %v2024, %v2032
        %v2034 = vcombine.high %v2024, %v2032
        %v2036 = vunpack.c.l.s4 1934713408
        %v2037 = vunpack.c.0.s8 %v2036
        %v2038 = vlaneseq
        %v2039 = vshrl.u32 %v2038, 7
        %v2040 = vsub.s32 %v2037, %v2039
        %v2041 = vrot.slane %v2033, %v2040
        %v2043 = vunpack.c.l.s4 1934713408
        %v2044 = vunpack.c.0.s8 %v2043
        %v2045 = vlaneseq
        %v2046 = vshrl.u32 %v2045, 7
        %v2047 = vsub.s32 %v2044, %v2046
        %v2048 = vrot.slane %v2034, %v2047
        %v2049 = vcombine.high %v2041, 0
        %v2050 = vcombine.high %v2048, 0
        %v2053 = vunpack.c.l.s4 1983009808
        %v2054 = vunpack.c.0.s8 %v2053
        %v2055 = vlaneseq
        %v2056 = vshrl.u32 %v2055, 7
        %v2057 = vsub.s32 %v2054, %v2056
        %v2058 = vrot.slane %v1973, %v2057
        %v2061 = vunpack.c.l.s4 1983009808
        %v2062 = vunpack.c.0.s8 %v2061
        %v2063 = vlaneseq
        %v2064 = vshrl.u32 %v2063, 7
        %v2065 = vsub.s32 %v2062, %v2064
        %v2066 = vrot.slane %v1979, %v2065
        %v2067 = vcombine.low %v2058, %v2066
        %v2068 = vcombine.high %v2058, %v2066
        %v2070 = vunpack.c.l.s4 1934713408
        %v2071 = vunpack.c.0.s8 %v2070
        %v2072 = vlaneseq
        %v2073 = vshrl.u32 %v2072, 7
        %v2074 = vsub.s32 %v2071, %v2073
        %v2075 = vrot.slane %v2067, %v2074
        %v2077 = vunpack.c.l.s4 1934713408
        %v2078 = vunpack.c.0.s8 %v2077
        %v2079 = vlaneseq
        %v2080 = vshrl.u32 %v2079, 7
        %v2081 = vsub.s32 %v2078, %v2080
        %v2082 = vrot.slane %v2068, %v2081
        %v2083 = vcombine.high %v2075, 0
        %v2084 = vcombine.high %v2082, 0
        %v2087 = vunpack.c.l.s4 1983009808
        %v2088 = vunpack.c.0.s8 %v2087
        %v2089 = vlaneseq
        %v2090 = vshrl.u32 %v2089, 7
        %v2091 = vsub.s32 %v2088, %v2090
        %v2092 = vrot.slane %v1976, %v2091
        %v2095 = vunpack.c.l.s4 1983009808
        %v2096 = vunpack.c.0.s8 %v2095
        %v2097 = vlaneseq
        %v2098 = vshrl.u32 %v2097, 7
        %v2099 = vsub.s32 %v2096, %v2098
        %v2100 = vrot.slane %v1982, %v2099
        %v2101 = vcombine.low %v2092, %v2100
        %v2102 = vcombine.high %v2092, %v2100
        %v2104 = vunpack.c.l.s4 1934713408
        %v2105 = vunpack.c.0.s8 %v2104
        %v2106 = vlaneseq
        %v2107 = vshrl.u32 %v2106, 7
        %v2108 = vsub.s32 %v2105, %v2107
        %v2109 = vrot.slane %v2101, %v2108
        %v2111 = vunpack.c.l.s4 1934713408
        %v2112 = vunpack.c.0.s8 %v2111
        %v2113 = vlaneseq
        %v2114 = vshrl.u32 %v2113, 7
        %v2115 = vsub.s32 %v2112, %v2114
        %v2116 = vrot.slane %v2102, %v2115
        %v2117 = vcombine.high %v2109, 0
        %v2118 = vcombine.high %v2116, 0
        %v2120 = vunpack.c.l.b16 %v2041
        %v2121 = vpack.c.b16 %v2120, %v2120
        %2122 = vrot.lane.b32.xlu0 %v2121, 16
        %v2123 = vpop.permute.xlu0 %2122
        %v2125 = vunpack.c.l.b16 %v2015
        %v2126 = vpack.c.b16 %v2125, %v2125
        %2127 = vrot.lane.b32.xlu0 %v2126, 32
        %v2128 = vpop.permute.xlu0 %2127
        %v2130 = vunpack.c.l.b16 %v2049
        %v2131 = vpack.c.b16 %v2130, %v2130
        %2132 = vrot.lane.b32.xlu0 %v2131, 48
        %v2133 = vpop.permute.xlu0 %2132
        %v2135 = vunpack.c.l.b16 %v2014
        %v2136 = vpack.c.b16 %v2135, %v2135
        %2137 = vrot.lane.b32.xlu0 %v2136, 64
        %v2138 = vpop.permute.xlu0 %2137
        %v2140 = vunpack.c.l.b16 %v2048
        %v2141 = vpack.c.b16 %v2140, %v2140
        %2142 = vrot.lane.b32.xlu0 %v2141, 80
        %v2143 = vpop.permute.xlu0 %2142
        %v2145 = vunpack.c.l.b16 %v2016
        %v2146 = vpack.c.b16 %v2145, %v2145
        %2147 = vrot.lane.b32.xlu0 %v2146, 96
        %v2148 = vpop.permute.xlu0 %2147
        %v2150 = vunpack.c.l.b16 %v2050
        %v2151 = vpack.c.b16 %v2150, %v2150
        %2152 = vrot.lane.b32.xlu0 %v2151, 112
        %v2153 = vpop.permute.xlu0 %2152
        %v2155 = vunpack.c.l.b16 %v2109
        %v2156 = vpack.c.b16 %v2155, %v2155
        %2157 = vrot.lane.b32.xlu0 %v2156, 16
        %v2158 = vpop.permute.xlu0 %2157
        %v2160 = vunpack.c.l.b16 %v2083
        %v2161 = vpack.c.b16 %v2160, %v2160
        %2162 = vrot.lane.b32.xlu0 %v2161, 32
        %v2163 = vpop.permute.xlu0 %2162
        %v2165 = vunpack.c.l.b16 %v2117
        %v2166 = vpack.c.b16 %v2165, %v2165
        %2167 = vrot.lane.b32.xlu0 %v2166, 48
        %v2168 = vpop.permute.xlu0 %2167
        %v2170 = vunpack.c.l.b16 %v2082
        %v2171 = vpack.c.b16 %v2170, %v2170
        %2172 = vrot.lane.b32.xlu0 %v2171, 64
        %v2173 = vpop.permute.xlu0 %2172
        %v2175 = vunpack.c.l.b16 %v2116
        %v2176 = vpack.c.b16 %v2175, %v2175
        %2177 = vrot.lane.b32.xlu0 %v2176, 80
        %v2178 = vpop.permute.xlu0 %2177
        %v2180 = vunpack.c.l.b16 %v2084
        %v2181 = vpack.c.b16 %v2180, %v2180
        %2182 = vrot.lane.b32.xlu0 %v2181, 96
        %v2183 = vpop.permute.xlu0 %2182
        %v2185 = vunpack.c.l.b16 %v2118
        %v2186 = vpack.c.b16 %v2185, %v2185
        %2187 = vrot.lane.b32.xlu0 %v2186, 112
        %v2188 = vpop.permute.xlu0 %2187
        %v2191 = vsel %vm470, %v2007, %v2123
        %v2193 = vsel %vm474, %v2191, %v2128
        %v2195 = vsel %vm477, %v2193, %v2133
        %v2197 = vsel %vm480, %v2195, %v2138
        %v2199 = vsel %vm483, %v2197, %v2143
        %v2201 = vsel %vm486, %v2199, %v2148
        %v2203 = vsel %vm489, %v2201, %v2153
        %v2206 = vsel %vm470, %v2075, %v2158
        %v2208 = vsel %vm474, %v2206, %v2163
        %v2210 = vsel %vm477, %v2208, %v2168
        %v2212 = vsel %vm480, %v2210, %v2173
        %v2214 = vsel %vm483, %v2212, %v2178
        %v2216 = vsel %vm486, %v2214, %v2183
        %v2218 = vsel %vm489, %v2216, %v2188
        %s2219 = scalar_lea.vmem %s2, 20
        %v2220 = vld [vmem:[%s2219] sm:$0xf]
        %v2222 = vsel %vm794, %v2220, 0
        %v2224 = vsel %vm798, %v2203, 0
        %v2226 = vsel %vm798, %v2218, 0
        %2228 = vmatprep.subr.bf16.mxu0 %v2226
        %2229 = vmatpush1.bf16.msra.mxu0 %v2224
        %2230 = vmatprep.subr.bf16.mxu0 0
        %2231 = vmatpush1.bf16.msra.mxu0 0
        %2232 = vmatprep.subr.bf16.mxu0 0
        %2233 = vmatpush1.bf16.msra.mxu0 0
        %2234 = vmatprep.subr.bf16.mxu0 0
        %2235 = vmatpush1.bf16.msra.mxu0 0
        %2236 = vmatprep.subr.bf16.mxu0 0
        %2237 = vmatpush1.bf16.msra.mxu0 0
        %2238 = vmatprep.subr.bf16.mxu0 0
        %2239 = vmatpush1.bf16.msra.mxu0 0
        %2240 = vmatprep.subr.bf16.mxu0 0
        %2241 = vmatpush1.bf16.msra.mxu0 0
        %2242 = vmatprep.subr.bf16.mxu0 0
        %2243 = vmatpush1.bf16.msra.mxu0 0
        %2244 = vmatprep.subr.bf16.mxu0 0
        %2245 = vmatpush1.bf16.msra.mxu0 0
        %2246 = vmatprep.subr.bf16.mxu0 0
        %2247 = vmatpush1.bf16.msra.mxu0 0
        %2248 = vmatprep.subr.bf16.mxu0 0
        %2249 = vmatpush1.bf16.msra.mxu0 0
        %2250 = vmatprep.subr.bf16.mxu0 0
        %2251 = vmatpush1.bf16.msra.mxu0 0
        %2252 = vmatprep.subr.bf16.mxu0 0
        %2253 = vmatpush1.bf16.msra.mxu0 0
        %2254 = vmatprep.subr.bf16.mxu0 0
        %2255 = vmatpush1.bf16.msra.mxu0 0
        %2256 = vmatprep.subr.bf16.mxu0 0
        %2257 = vmatpush1.bf16.msra.mxu0 0
        %2258 = vmatprep.subr.bf16.mxu0 0
        %2259 = vmatpush1.bf16.msra.mxu0 0
        %2260 = vmatprep.mubr.bf16.mxu0 0
        %2261 = vmatmul.mubr.bf16.gmra.mrb[0].mxu0 %v2222
        %v2262 = vpop.f32.mrb[0].mxu0
        %v2263 = vadd.f32 0.0, %v2262
        %v2264 = vpop.f32.mrb[0].mxu0
        %v2265 = vadd.f32 0.0, %v2264
        %v2266 = vpop.f32.mrb[0].mxu0
        %v2267 = vpop.f32.mrb[0].mxu0
        %2268 = vdwg.mxu0
        %v2269 = vadd.f32 %v1941, %v2263
        %v2270 = vadd.f32 %v1942, %v2265
        %vm2275 = vcmask 1042432
        %vm2276 = vcmask 1046532
        %vm2277 = vmor %vm2275, %vm2276
        %v2278 = vrot.slane %v228, 5
        %v2279 = vrot.slane %v2278, 4
        %v2280 = vrot.slane %v229, 5
        %v2281 = vsel %vm2277, %v2279, %v2280
        %v2282 = vrot.slane %v2280, 4
        %v2283 = vrot.slane %v230, 5
        %v2284 = vsel %vm2277, %v2282, %v2283
        %v2285 = vrot.slane %v231, 5
        %v2286 = vrot.slane %v2285, 4
        %v2287 = vrot.slane %v232, 5
        %v2288 = vsel %vm2277, %v2286, %v2287
        %v2289 = vrot.slane %v2287, 4
        %v2290 = vrot.slane %v233, 5
        %v2291 = vsel %vm2277, %v2289, %v2290
        %v2292 = vrot.slane %v234, 5
        %v2293 = vrot.slane %v2292, 4
        %v2294 = vrot.slane %v235, 5
        %v2295 = vsel %vm2277, %v2293, %v2294
        %v2296 = vrot.slane %v2294, 4
        %v2297 = vrot.slane %v236, 5
        %v2298 = vsel %vm2277, %v2296, %v2297
        %v2299 = vrot.slane %v237, 5
        %v2300 = vrot.slane %v2299, 4
        %v2301 = vrot.slane %v238, 5
        %v2302 = vsel %vm2277, %v2300, %v2301
        %v2303 = vrot.slane %v2301, 4
        %v2304 = vrot.slane %v239, 5
        %v2305 = vsel %vm2277, %v2303, %v2304
        %v2308 = vpack.i.b16 %v2288, %v2281
        %v2309 = vshrl.u32 %v2281, 16
        %v2310 = vshrl.u32 %v2288, 16
        %v2311 = vpack.i.b16 %v2310, %v2309
        %v2314 = vpack.i.b16 %v2302, %v2295
        %v2315 = vshrl.u32 %v2295, 16
        %v2316 = vshrl.u32 %v2302, 16
        %v2317 = vpack.i.b16 %v2316, %v2315
        %v2320 = vpack.i.b16 %v2291, %v2284
        %v2321 = vshrl.u32 %v2284, 16
        %v2322 = vshrl.u32 %v2291, 16
        %v2323 = vpack.i.b16 %v2322, %v2321
        %v2326 = vpack.i.b16 %v2305, %v2298
        %v2327 = vshrl.u32 %v2298, 16
        %v2328 = vshrl.u32 %v2305, 16
        %v2329 = vpack.i.b16 %v2328, %v2327
        %v2332 = vunpack.c.l.s4 1983009808
        %v2333 = vunpack.c.0.s8 %v2332
        %v2334 = vlaneseq
        %v2335 = vshrl.u32 %v2334, 7
        %v2336 = vsub.s32 %v2333, %v2335
        %v2337 = vrot.slane %v2308, %v2336
        %v2340 = vunpack.c.l.s4 1983009808
        %v2341 = vunpack.c.0.s8 %v2340
        %v2342 = vlaneseq
        %v2343 = vshrl.u32 %v2342, 7
        %v2344 = vsub.s32 %v2341, %v2343
        %v2345 = vrot.slane %v2314, %v2344
        %v2346 = vcombine.low %v2337, %v2345
        %v2347 = vcombine.high %v2337, %v2345
        %v2349 = vunpack.c.l.s4 1934713408
        %v2350 = vunpack.c.0.s8 %v2349
        %v2351 = vlaneseq
        %v2352 = vshrl.u32 %v2351, 7
        %v2353 = vsub.s32 %v2350, %v2352
        %v2354 = vrot.slane %v2346, %v2353
        %v2356 = vunpack.c.l.s4 1934713408
        %v2357 = vunpack.c.0.s8 %v2356
        %v2358 = vlaneseq
        %v2359 = vshrl.u32 %v2358, 7
        %v2360 = vsub.s32 %v2357, %v2359
        %v2361 = vrot.slane %v2347, %v2360
        %v2362 = vcombine.high %v2354, 0
        %v2363 = vcombine.high %v2361, 0
        %v2366 = vunpack.c.l.s4 1983009808
        %v2367 = vunpack.c.0.s8 %v2366
        %v2368 = vlaneseq
        %v2369 = vshrl.u32 %v2368, 7
        %v2370 = vsub.s32 %v2367, %v2369
        %v2371 = vrot.slane %v2311, %v2370
        %v2374 = vunpack.c.l.s4 1983009808
        %v2375 = vunpack.c.0.s8 %v2374
        %v2376 = vlaneseq
        %v2377 = vshrl.u32 %v2376, 7
        %v2378 = vsub.s32 %v2375, %v2377
        %v2379 = vrot.slane %v2317, %v2378
        %v2380 = vcombine.low %v2371, %v2379
        %v2381 = vcombine.high %v2371, %v2379
        %v2383 = vunpack.c.l.s4 1934713408
        %v2384 = vunpack.c.0.s8 %v2383
        %v2385 = vlaneseq
        %v2386 = vshrl.u32 %v2385, 7
        %v2387 = vsub.s32 %v2384, %v2386
        %v2388 = vrot.slane %v2380, %v2387
        %v2390 = vunpack.c.l.s4 1934713408
        %v2391 = vunpack.c.0.s8 %v2390
        %v2392 = vlaneseq
        %v2393 = vshrl.u32 %v2392, 7
        %v2394 = vsub.s32 %v2391, %v2393
        %v2395 = vrot.slane %v2381, %v2394
        %v2396 = vcombine.high %v2388, 0
        %v2397 = vcombine.high %v2395, 0
        %v2400 = vunpack.c.l.s4 1983009808
        %v2401 = vunpack.c.0.s8 %v2400
        %v2402 = vlaneseq
        %v2403 = vshrl.u32 %v2402, 7
        %v2404 = vsub.s32 %v2401, %v2403
        %v2405 = vrot.slane %v2320, %v2404
        %v2408 = vunpack.c.l.s4 1983009808
        %v2409 = vunpack.c.0.s8 %v2408
        %v2410 = vlaneseq
        %v2411 = vshrl.u32 %v2410, 7
        %v2412 = vsub.s32 %v2409, %v2411
        %v2413 = vrot.slane %v2326, %v2412
        %v2414 = vcombine.low %v2405, %v2413
        %v2415 = vcombine.high %v2405, %v2413
        %v2417 = vunpack.c.l.s4 1934713408
        %v2418 = vunpack.c.0.s8 %v2417
        %v2419 = vlaneseq
        %v2420 = vshrl.u32 %v2419, 7
        %v2421 = vsub.s32 %v2418, %v2420
        %v2422 = vrot.slane %v2414, %v2421
        %v2424 = vunpack.c.l.s4 1934713408
        %v2425 = vunpack.c.0.s8 %v2424
        %v2426 = vlaneseq
        %v2427 = vshrl.u32 %v2426, 7
        %v2428 = vsub.s32 %v2425, %v2427
        %v2429 = vrot.slane %v2415, %v2428
        %v2430 = vcombine.high %v2422, 0
        %v2431 = vcombine.high %v2429, 0
        %v2434 = vunpack.c.l.s4 1983009808
        %v2435 = vunpack.c.0.s8 %v2434
        %v2436 = vlaneseq
        %v2437 = vshrl.u32 %v2436, 7
        %v2438 = vsub.s32 %v2435, %v2437
        %v2439 = vrot.slane %v2323, %v2438
        %v2442 = vunpack.c.l.s4 1983009808
        %v2443 = vunpack.c.0.s8 %v2442
        %v2444 = vlaneseq
        %v2445 = vshrl.u32 %v2444, 7
        %v2446 = vsub.s32 %v2443, %v2445
        %v2447 = vrot.slane %v2329, %v2446
        %v2448 = vcombine.low %v2439, %v2447
        %v2449 = vcombine.high %v2439, %v2447
        %v2451 = vunpack.c.l.s4 1934713408
        %v2452 = vunpack.c.0.s8 %v2451
        %v2453 = vlaneseq
        %v2454 = vshrl.u32 %v2453, 7
        %v2455 = vsub.s32 %v2452, %v2454
        %v2456 = vrot.slane %v2448, %v2455
        %v2458 = vunpack.c.l.s4 1934713408
        %v2459 = vunpack.c.0.s8 %v2458
        %v2460 = vlaneseq
        %v2461 = vshrl.u32 %v2460, 7
        %v2462 = vsub.s32 %v2459, %v2461
        %v2463 = vrot.slane %v2449, %v2462
        %v2464 = vcombine.high %v2456, 0
        %v2465 = vcombine.high %v2463, 0
        %v2467 = vunpack.c.l.b16 %v2388
        %v2468 = vpack.c.b16 %v2467, %v2467
        %2469 = vrot.lane.b32.xlu0 %v2468, 16
        %v2470 = vpop.permute.xlu0 %2469
        %v2472 = vunpack.c.l.b16 %v2362
        %v2473 = vpack.c.b16 %v2472, %v2472
        %2474 = vrot.lane.b32.xlu0 %v2473, 32
        %v2475 = vpop.permute.xlu0 %2474
        %v2477 = vunpack.c.l.b16 %v2396
        %v2478 = vpack.c.b16 %v2477, %v2477
        %2479 = vrot.lane.b32.xlu0 %v2478, 48
        %v2480 = vpop.permute.xlu0 %2479
        %v2482 = vunpack.c.l.b16 %v2361
        %v2483 = vpack.c.b16 %v2482, %v2482
        %2484 = vrot.lane.b32.xlu0 %v2483, 64
        %v2485 = vpop.permute.xlu0 %2484
        %v2487 = vunpack.c.l.b16 %v2395
        %v2488 = vpack.c.b16 %v2487, %v2487
        %2489 = vrot.lane.b32.xlu0 %v2488, 80
        %v2490 = vpop.permute.xlu0 %2489
        %v2492 = vunpack.c.l.b16 %v2363
        %v2493 = vpack.c.b16 %v2492, %v2492
        %2494 = vrot.lane.b32.xlu0 %v2493, 96
        %v2495 = vpop.permute.xlu0 %2494
        %v2497 = vunpack.c.l.b16 %v2397
        %v2498 = vpack.c.b16 %v2497, %v2497
        %2499 = vrot.lane.b32.xlu0 %v2498, 112
        %v2500 = vpop.permute.xlu0 %2499
        %v2502 = vunpack.c.l.b16 %v2456
        %v2503 = vpack.c.b16 %v2502, %v2502
        %2504 = vrot.lane.b32.xlu0 %v2503, 16
        %v2505 = vpop.permute.xlu0 %2504
        %v2507 = vunpack.c.l.b16 %v2430
        %v2508 = vpack.c.b16 %v2507, %v2507
        %2509 = vrot.lane.b32.xlu0 %v2508, 32
        %v2510 = vpop.permute.xlu0 %2509
        %v2512 = vunpack.c.l.b16 %v2464
        %v2513 = vpack.c.b16 %v2512, %v2512
        %2514 = vrot.lane.b32.xlu0 %v2513, 48
        %v2515 = vpop.permute.xlu0 %2514
        %v2517 = vunpack.c.l.b16 %v2429
        %v2518 = vpack.c.b16 %v2517, %v2517
        %2519 = vrot.lane.b32.xlu0 %v2518, 64
        %v2520 = vpop.permute.xlu0 %2519
        %v2522 = vunpack.c.l.b16 %v2463
        %v2523 = vpack.c.b16 %v2522, %v2522
        %2524 = vrot.lane.b32.xlu0 %v2523, 80
        %v2525 = vpop.permute.xlu0 %2524
        %v2527 = vunpack.c.l.b16 %v2431
        %v2528 = vpack.c.b16 %v2527, %v2527
        %2529 = vrot.lane.b32.xlu0 %v2528, 96
        %v2530 = vpop.permute.xlu0 %2529
        %v2532 = vunpack.c.l.b16 %v2465
        %v2533 = vpack.c.b16 %v2532, %v2532
        %2534 = vrot.lane.b32.xlu0 %v2533, 112
        %v2535 = vpop.permute.xlu0 %2534
        %v2538 = vsel %vm470, %v2354, %v2470
        %v2540 = vsel %vm474, %v2538, %v2475
        %v2542 = vsel %vm477, %v2540, %v2480
        %v2544 = vsel %vm480, %v2542, %v2485
        %v2546 = vsel %vm483, %v2544, %v2490
        %v2548 = vsel %vm486, %v2546, %v2495
        %v2550 = vsel %vm489, %v2548, %v2500
        %v2553 = vsel %vm470, %v2422, %v2505
        %v2555 = vsel %vm474, %v2553, %v2510
        %v2557 = vsel %vm477, %v2555, %v2515
        %v2559 = vsel %vm480, %v2557, %v2520
        %v2561 = vsel %vm483, %v2559, %v2525
        %v2563 = vsel %vm486, %v2561, %v2530
        %v2565 = vsel %vm489, %v2563, %v2535
        %s2566 = scalar_lea.vmem %s2, 24
        %v2567 = vld [vmem:[%s2566] sm:$0xf]
        %v2569 = vsel %vm794, %v2567, 0
        %v2571 = vsel %vm798, %v2550, 0
        %v2573 = vsel %vm798, %v2565, 0
        %2575 = vmatprep.subr.bf16.mxu0 %v2573
        %2576 = vmatpush1.bf16.msra.mxu0 %v2571
        %2577 = vmatprep.subr.bf16.mxu0 0
        %2578 = vmatpush1.bf16.msra.mxu0 0
        %2579 = vmatprep.subr.bf16.mxu0 0
        %2580 = vmatpush1.bf16.msra.mxu0 0
        %2581 = vmatprep.subr.bf16.mxu0 0
        %2582 = vmatpush1.bf16.msra.mxu0 0
        %2583 = vmatprep.subr.bf16.mxu0 0
        %2584 = vmatpush1.bf16.msra.mxu0 0
        %2585 = vmatprep.subr.bf16.mxu0 0
        %2586 = vmatpush1.bf16.msra.mxu0 0
        %2587 = vmatprep.subr.bf16.mxu0 0
        %2588 = vmatpush1.bf16.msra.mxu0 0
        %2589 = vmatprep.subr.bf16.mxu0 0
        %2590 = vmatpush1.bf16.msra.mxu0 0
        %2591 = vmatprep.subr.bf16.mxu0 0
        %2592 = vmatpush1.bf16.msra.mxu0 0
        %2593 = vmatprep.subr.bf16.mxu0 0
        %2594 = vmatpush1.bf16.msra.mxu0 0
        %2595 = vmatprep.subr.bf16.mxu0 0
        %2596 = vmatpush1.bf16.msra.mxu0 0
        %2597 = vmatprep.subr.bf16.mxu0 0
        %2598 = vmatpush1.bf16.msra.mxu0 0
        %2599 = vmatprep.subr.bf16.mxu0 0
        %2600 = vmatpush1.bf16.msra.mxu0 0
        %2601 = vmatprep.subr.bf16.mxu0 0
        %2602 = vmatpush1.bf16.msra.mxu0 0
        %2603 = vmatprep.subr.bf16.mxu0 0
        %2604 = vmatpush1.bf16.msra.mxu0 0
        %2605 = vmatprep.subr.bf16.mxu0 0
        %2606 = vmatpush1.bf16.msra.mxu0 0
        %2607 = vmatprep.mubr.bf16.mxu0 0
        %2608 = vmatmul.mubr.bf16.gmra.mrb[0].mxu0 %v2569
        %v2609 = vpop.f32.mrb[0].mxu0
        %v2610 = vadd.f32 0.0, %v2609
        %v2611 = vpop.f32.mrb[0].mxu0
        %v2612 = vadd.f32 0.0, %v2611
        %v2613 = vpop.f32.mrb[0].mxu0
        %v2614 = vpop.f32.mrb[0].mxu0
        %2615 = vdwg.mxu0
        %v2616 = vadd.f32 %v2269, %v2610
        %v2617 = vadd.f32 %v2270, %v2612
        %2618 = vrot.lane.b32.xlu0 %v2281, 127
        %v2619 = vpop.permute.xlu0 %2618
        %2620 = vrot.lane.b32.xlu0 %v2284, 127
        %v2621 = vpop.permute.xlu0 %2620
        %2622 = vrot.lane.b32.xlu0 %v2288, 127
        %v2623 = vpop.permute.xlu0 %2622
        %2624 = vrot.lane.b32.xlu0 %v2291, 127
        %v2625 = vpop.permute.xlu0 %2624
        %2626 = vrot.lane.b32.xlu0 %v2295, 127
        %v2627 = vpop.permute.xlu0 %2626
        %2628 = vrot.lane.b32.xlu0 %v2298, 127
        %v2629 = vpop.permute.xlu0 %2628
        %2630 = vrot.lane.b32.xlu0 %v2302, 127
        %v2631 = vpop.permute.xlu0 %2630
        %2632 = vrot.lane.b32.xlu0 %v2305, 127
        %v2633 = vpop.permute.xlu0 %2632
        %v2636 = vpack.i.b16 %v2623, %v2619
        %v2637 = vshrl.u32 %v2619, 16
        %v2638 = vshrl.u32 %v2623, 16
        %v2639 = vpack.i.b16 %v2638, %v2637
        %v2642 = vpack.i.b16 %v2631, %v2627
        %v2643 = vshrl.u32 %v2627, 16
        %v2644 = vshrl.u32 %v2631, 16
        %v2645 = vpack.i.b16 %v2644, %v2643
        %v2648 = vpack.i.b16 %v2625, %v2621
        %v2649 = vshrl.u32 %v2621, 16
        %v2650 = vshrl.u32 %v2625, 16
        %v2651 = vpack.i.b16 %v2650, %v2649
        %v2654 = vpack.i.b16 %v2633, %v2629
        %v2655 = vshrl.u32 %v2629, 16
        %v2656 = vshrl.u32 %v2633, 16
        %v2657 = vpack.i.b16 %v2656, %v2655
        %v2660 = vunpack.c.l.s4 1983009808
        %v2661 = vunpack.c.0.s8 %v2660
        %v2662 = vlaneseq
        %v2663 = vshrl.u32 %v2662, 7
        %v2664 = vsub.s32 %v2661, %v2663
        %v2665 = vrot.slane %v2636, %v2664
        %v2668 = vunpack.c.l.s4 1983009808
        %v2669 = vunpack.c.0.s8 %v2668
        %v2670 = vlaneseq
        %v2671 = vshrl.u32 %v2670, 7
        %v2672 = vsub.s32 %v2669, %v2671
        %v2673 = vrot.slane %v2642, %v2672
        %v2674 = vcombine.low %v2665, %v2673
        %v2675 = vcombine.high %v2665, %v2673
        %v2677 = vunpack.c.l.s4 1934713408
        %v2678 = vunpack.c.0.s8 %v2677
        %v2679 = vlaneseq
        %v2680 = vshrl.u32 %v2679, 7
        %v2681 = vsub.s32 %v2678, %v2680
        %v2682 = vrot.slane %v2674, %v2681
        %v2684 = vunpack.c.l.s4 1934713408
        %v2685 = vunpack.c.0.s8 %v2684
        %v2686 = vlaneseq
        %v2687 = vshrl.u32 %v2686, 7
        %v2688 = vsub.s32 %v2685, %v2687
        %v2689 = vrot.slane %v2675, %v2688
        %v2690 = vcombine.high %v2682, 0
        %v2691 = vcombine.high %v2689, 0
        %v2694 = vunpack.c.l.s4 1983009808
        %v2695 = vunpack.c.0.s8 %v2694
        %v2696 = vlaneseq
        %v2697 = vshrl.u32 %v2696, 7
        %v2698 = vsub.s32 %v2695, %v2697
        %v2699 = vrot.slane %v2639, %v2698
        %v2702 = vunpack.c.l.s4 1983009808
        %v2703 = vunpack.c.0.s8 %v2702
        %v2704 = vlaneseq
        %v2705 = vshrl.u32 %v2704, 7
        %v2706 = vsub.s32 %v2703, %v2705
        %v2707 = vrot.slane %v2645, %v2706
        %v2708 = vcombine.low %v2699, %v2707
        %v2709 = vcombine.high %v2699, %v2707
        %v2711 = vunpack.c.l.s4 1934713408
        %v2712 = vunpack.c.0.s8 %v2711
        %v2713 = vlaneseq
        %v2714 = vshrl.u32 %v2713, 7
        %v2715 = vsub.s32 %v2712, %v2714
        %v2716 = vrot.slane %v2708, %v2715
        %v2718 = vunpack.c.l.s4 1934713408
        %v2719 = vunpack.c.0.s8 %v2718
        %v2720 = vlaneseq
        %v2721 = vshrl.u32 %v2720, 7
        %v2722 = vsub.s32 %v2719, %v2721
        %v2723 = vrot.slane %v2709, %v2722
        %v2724 = vcombine.high %v2716, 0
        %v2725 = vcombine.high %v2723, 0
        %v2728 = vunpack.c.l.s4 1983009808
        %v2729 = vunpack.c.0.s8 %v2728
        %v2730 = vlaneseq
        %v2731 = vshrl.u32 %v2730, 7
        %v2732 = vsub.s32 %v2729, %v2731
        %v2733 = vrot.slane %v2648, %v2732
        %v2736 = vunpack.c.l.s4 1983009808
        %v2737 = vunpack.c.0.s8 %v2736
        %v2738 = vlaneseq
        %v2739 = vshrl.u32 %v2738, 7
        %v2740 = vsub.s32 %v2737, %v2739
        %v2741 = vrot.slane %v2654, %v2740
        %v2742 = vcombine.low %v2733, %v2741
        %v2743 = vcombine.high %v2733, %v2741
        %v2745 = vunpack.c.l.s4 1934713408
        %v2746 = vunpack.c.0.s8 %v2745
        %v2747 = vlaneseq
        %v2748 = vshrl.u32 %v2747, 7
        %v2749 = vsub.s32 %v2746, %v2748
        %v2750 = vrot.slane %v2742, %v2749
        %v2752 = vunpack.c.l.s4 1934713408
        %v2753 = vunpack.c.0.s8 %v2752
        %v2754 = vlaneseq
        %v2755 = vshrl.u32 %v2754, 7
        %v2756 = vsub.s32 %v2753, %v2755
        %v2757 = vrot.slane %v2743, %v2756
        %v2758 = vcombine.high %v2750, 0
        %v2759 = vcombine.high %v2757, 0
        %v2762 = vunpack.c.l.s4 1983009808
        %v2763 = vunpack.c.0.s8 %v2762
        %v2764 = vlaneseq
        %v2765 = vshrl.u32 %v2764, 7
        %v2766 = vsub.s32 %v2763, %v2765
        %v2767 = vrot.slane %v2651, %v2766
        %v2770 = vunpack.c.l.s4 1983009808
        %v2771 = vunpack.c.0.s8 %v2770
        %v2772 = vlaneseq
        %v2773 = vshrl.u32 %v2772, 7
        %v2774 = vsub.s32 %v2771, %v2773
        %v2775 = vrot.slane %v2657, %v2774
        %v2776 = vcombine.low %v2767, %v2775
        %v2777 = vcombine.high %v2767, %v2775
        %v2779 = vunpack.c.l.s4 1934713408
        %v2780 = vunpack.c.0.s8 %v2779
        %v2781 = vlaneseq
        %v2782 = vshrl.u32 %v2781, 7
        %v2783 = vsub.s32 %v2780, %v2782
        %v2784 = vrot.slane %v2776, %v2783
        %v2786 = vunpack.c.l.s4 1934713408
        %v2787 = vunpack.c.0.s8 %v2786
        %v2788 = vlaneseq
        %v2789 = vshrl.u32 %v2788, 7
        %v2790 = vsub.s32 %v2787, %v2789
        %v2791 = vrot.slane %v2777, %v2790
        %v2792 = vcombine.high %v2784, 0
        %v2793 = vcombine.high %v2791, 0
        %v2795 = vunpack.c.l.b16 %v2716
        %v2796 = vpack.c.b16 %v2795, %v2795
        %2797 = vrot.lane.b32.xlu0 %v2796, 16
        %v2798 = vpop.permute.xlu0 %2797
        %v2800 = vunpack.c.l.b16 %v2690
        %v2801 = vpack.c.b16 %v2800, %v2800
        %2802 = vrot.lane.b32.xlu0 %v2801, 32
        %v2803 = vpop.permute.xlu0 %2802
        %v2805 = vunpack.c.l.b16 %v2724
        %v2806 = vpack.c.b16 %v2805, %v2805
        %2807 = vrot.lane.b32.xlu0 %v2806, 48
        %v2808 = vpop.permute.xlu0 %2807
        %v2810 = vunpack.c.l.b16 %v2689
        %v2811 = vpack.c.b16 %v2810, %v2810
        %2812 = vrot.lane.b32.xlu0 %v2811, 64
        %v2813 = vpop.permute.xlu0 %2812
        %v2815 = vunpack.c.l.b16 %v2723
        %v2816 = vpack.c.b16 %v2815, %v2815
        %2817 = vrot.lane.b32.xlu0 %v2816, 80
        %v2818 = vpop.permute.xlu0 %2817
        %v2820 = vunpack.c.l.b16 %v2691
        %v2821 = vpack.c.b16 %v2820, %v2820
        %2822 = vrot.lane.b32.xlu0 %v2821, 96
        %v2823 = vpop.permute.xlu0 %2822
        %v2825 = vunpack.c.l.b16 %v2725
        %v2826 = vpack.c.b16 %v2825, %v2825
        %2827 = vrot.lane.b32.xlu0 %v2826, 112
        %v2828 = vpop.permute.xlu0 %2827
        %v2830 = vunpack.c.l.b16 %v2784
        %v2831 = vpack.c.b16 %v2830, %v2830
        %2832 = vrot.lane.b32.xlu0 %v2831, 16
        %v2833 = vpop.permute.xlu0 %2832
        %v2835 = vunpack.c.l.b16 %v2758
        %v2836 = vpack.c.b16 %v2835, %v2835
        %2837 = vrot.lane.b32.xlu0 %v2836, 32
        %v2838 = vpop.permute.xlu0 %2837
        %v2840 = vunpack.c.l.b16 %v2792
        %v2841 = vpack.c.b16 %v2840, %v2840
        %2842 = vrot.lane.b32.xlu0 %v2841, 48
        %v2843 = vpop.permute.xlu0 %2842
        %v2845 = vunpack.c.l.b16 %v2757
        %v2846 = vpack.c.b16 %v2845, %v2845
        %2847 = vrot.lane.b32.xlu0 %v2846, 64
        %v2848 = vpop.permute.xlu0 %2847
        %v2850 = vunpack.c.l.b16 %v2791
        %v2851 = vpack.c.b16 %v2850, %v2850
        %2852 = vrot.lane.b32.xlu0 %v2851, 80
        %v2853 = vpop.permute.xlu0 %2852
        %v2855 = vunpack.c.l.b16 %v2759
        %v2856 = vpack.c.b16 %v2855, %v2855
        %2857 = vrot.lane.b32.xlu0 %v2856, 96
        %v2858 = vpop.permute.xlu0 %2857
        %v2860 = vunpack.c.l.b16 %v2793
        %v2861 = vpack.c.b16 %v2860, %v2860
        %2862 = vrot.lane.b32.xlu0 %v2861, 112
        %v2863 = vpop.permute.xlu0 %2862
        %v2866 = vsel %vm470, %v2682, %v2798
        %v2868 = vsel %vm474, %v2866, %v2803
        %v2870 = vsel %vm477, %v2868, %v2808
        %v2872 = vsel %vm480, %v2870, %v2813
        %v2874 = vsel %vm483, %v2872, %v2818
        %v2876 = vsel %vm486, %v2874, %v2823
        %v2878 = vsel %vm489, %v2876, %v2828
        %v2881 = vsel %vm470, %v2750, %v2833
        %v2883 = vsel %vm474, %v2881, %v2838
        %v2885 = vsel %vm477, %v2883, %v2843
        %v2887 = vsel %vm480, %v2885, %v2848
        %v2889 = vsel %vm483, %v2887, %v2853
        %v2891 = vsel %vm486, %v2889, %v2858
        %v2893 = vsel %vm489, %v2891, %v2863
        %s2894 = scalar_lea.vmem %s2, 28
        %v2895 = vld [vmem:[%s2894] sm:$0xf]
        %v2897 = vsel %vm794, %v2895, 0
        %v2899 = vsel %vm798, %v2878, 0
        %v2901 = vsel %vm798, %v2893, 0
        %2903 = vmatprep.subr.bf16.mxu0 %v2901
        %2904 = vmatpush1.bf16.msra.mxu0 %v2899
        %2905 = vmatprep.subr.bf16.mxu0 0
        %2906 = vmatpush1.bf16.msra.mxu0 0
        %2907 = vmatprep.subr.bf16.mxu0 0
        %2908 = vmatpush1.bf16.msra.mxu0 0
        %2909 = vmatprep.subr.bf16.mxu0 0
        %2910 = vmatpush1.bf16.msra.mxu0 0
        %2911 = vmatprep.subr.bf16.mxu0 0
        %2912 = vmatpush1.bf16.msra.mxu0 0
        %2913 = vmatprep.subr.bf16.mxu0 0
        %2914 = vmatpush1.bf16.msra.mxu0 0
        %2915 = vmatprep.subr.bf16.mxu0 0
        %2916 = vmatpush1.bf16.msra.mxu0 0
        %2917 = vmatprep.subr.bf16.mxu0 0
        %2918 = vmatpush1.bf16.msra.mxu0 0
        %2919 = vmatprep.subr.bf16.mxu0 0
        %2920 = vmatpush1.bf16.msra.mxu0 0
        %2921 = vmatprep.subr.bf16.mxu0 0
        %2922 = vmatpush1.bf16.msra.mxu0 0
        %2923 = vmatprep.subr.bf16.mxu0 0
        %2924 = vmatpush1.bf16.msra.mxu0 0
        %2925 = vmatprep.subr.bf16.mxu0 0
        %2926 = vmatpush1.bf16.msra.mxu0 0
        %2927 = vmatprep.subr.bf16.mxu0 0
        %2928 = vmatpush1.bf16.msra.mxu0 0
        %2929 = vmatprep.subr.bf16.mxu0 0
        %2930 = vmatpush1.bf16.msra.mxu0 0
        %2931 = vmatprep.subr.bf16.mxu0 0
        %2932 = vmatpush1.bf16.msra.mxu0 0
        %2933 = vmatprep.subr.bf16.mxu0 0
        %2934 = vmatpush1.bf16.msra.mxu0 0
        %2935 = vmatprep.mubr.bf16.mxu0 0
        %2936 = vmatmul.mubr.bf16.gmra.mrb[0].mxu0 %v2897
        %v2937 = vpop.f32.mrb[0].mxu0
        %v2938 = vadd.f32 0.0, %v2937
        %v2939 = vpop.f32.mrb[0].mxu0
        %v2940 = vadd.f32 0.0, %v2939
        %v2941 = vpop.f32.mrb[0].mxu0
        %v2942 = vpop.f32.mrb[0].mxu0
        %2943 = vdwg.mxu0
        %v2944 = vadd.f32 %v2616, %v2938
        %v2945 = vadd.f32 %v2617, %v2940
        %2946 = vrot.lane.b32.xlu0 %v2281, 126
        %v2947 = vpop.permute.xlu0 %2946
        %2948 = vrot.lane.b32.xlu0 %v2284, 126
        %v2949 = vpop.permute.xlu0 %2948
        %2950 = vrot.lane.b32.xlu0 %v2288, 126
        %v2951 = vpop.permute.xlu0 %2950
        %2952 = vrot.lane.b32.xlu0 %v2291, 126
        %v2953 = vpop.permute.xlu0 %2952
        %2954 = vrot.lane.b32.xlu0 %v2295, 126
        %v2955 = vpop.permute.xlu0 %2954
        %2956 = vrot.lane.b32.xlu0 %v2298, 126
        %v2957 = vpop.permute.xlu0 %2956
        %2958 = vrot.lane.b32.xlu0 %v2302, 126
        %v2959 = vpop.permute.xlu0 %2958
        %2960 = vrot.lane.b32.xlu0 %v2305, 126
        %v2961 = vpop.permute.xlu0 %2960
        %v2964 = vpack.i.b16 %v2951, %v2947
        %v2965 = vshrl.u32 %v2947, 16
        %v2966 = vshrl.u32 %v2951, 16
        %v2967 = vpack.i.b16 %v2966, %v2965
        %v2970 = vpack.i.b16 %v2959, %v2955
        %v2971 = vshrl.u32 %v2955, 16
        %v2972 = vshrl.u32 %v2959, 16
        %v2973 = vpack.i.b16 %v2972, %v2971
        %v2976 = vpack.i.b16 %v2953, %v2949
        %v2977 = vshrl.u32 %v2949, 16
        %v2978 = vshrl.u32 %v2953, 16
        %v2979 = vpack.i.b16 %v2978, %v2977
        %v2982 = vpack.i.b16 %v2961, %v2957
        %v2983 = vshrl.u32 %v2957, 16
        %v2984 = vshrl.u32 %v2961, 16
        %v2985 = vpack.i.b16 %v2984, %v2983
        %v2988 = vunpack.c.l.s4 1983009808
        %v2989 = vunpack.c.0.s8 %v2988
        %v2990 = vlaneseq
        %v2991 = vshrl.u32 %v2990, 7
        %v2992 = vsub.s32 %v2989, %v2991
        %v2993 = vrot.slane %v2964, %v2992
        %v2996 = vunpack.c.l.s4 1983009808
        %v2997 = vunpack.c.0.s8 %v2996
        %v2998 = vlaneseq
        %v2999 = vshrl.u32 %v2998, 7
        %v3000 = vsub.s32 %v2997, %v2999
        %v3001 = vrot.slane %v2970, %v3000
        %v3002 = vcombine.low %v2993, %v3001
        %v3003 = vcombine.high %v2993, %v3001
        %v3005 = vunpack.c.l.s4 1934713408
        %v3006 = vunpack.c.0.s8 %v3005
        %v3007 = vlaneseq
        %v3008 = vshrl.u32 %v3007, 7
        %v3009 = vsub.s32 %v3006, %v3008
        %v3010 = vrot.slane %v3002, %v3009
        %v3012 = vunpack.c.l.s4 1934713408
        %v3013 = vunpack.c.0.s8 %v3012
        %v3014 = vlaneseq
        %v3015 = vshrl.u32 %v3014, 7
        %v3016 = vsub.s32 %v3013, %v3015
        %v3017 = vrot.slane %v3003, %v3016
        %v3018 = vcombine.high %v3010, 0
        %v3019 = vcombine.high %v3017, 0
        %v3022 = vunpack.c.l.s4 1983009808
        %v3023 = vunpack.c.0.s8 %v3022
        %v3024 = vlaneseq
        %v3025 = vshrl.u32 %v3024, 7
        %v3026 = vsub.s32 %v3023, %v3025
        %v3027 = vrot.slane %v2967, %v3026
        %v3030 = vunpack.c.l.s4 1983009808
        %v3031 = vunpack.c.0.s8 %v3030
        %v3032 = vlaneseq
        %v3033 = vshrl.u32 %v3032, 7
        %v3034 = vsub.s32 %v3031, %v3033
        %v3035 = vrot.slane %v2973, %v3034
        %v3036 = vcombine.low %v3027, %v3035
        %v3037 = vcombine.high %v3027, %v3035
        %v3039 = vunpack.c.l.s4 1934713408
        %v3040 = vunpack.c.0.s8 %v3039
        %v3041 = vlaneseq
        %v3042 = vshrl.u32 %v3041, 7
        %v3043 = vsub.s32 %v3040, %v3042
        %v3044 = vrot.slane %v3036, %v3043
        %v3046 = vunpack.c.l.s4 1934713408
        %v3047 = vunpack.c.0.s8 %v3046
        %v3048 = vlaneseq
        %v3049 = vshrl.u32 %v3048, 7
        %v3050 = vsub.s32 %v3047, %v3049
        %v3051 = vrot.slane %v3037, %v3050
        %v3052 = vcombine.high %v3044, 0
        %v3053 = vcombine.high %v3051, 0
        %v3056 = vunpack.c.l.s4 1983009808
        %v3057 = vunpack.c.0.s8 %v3056
        %v3058 = vlaneseq
        %v3059 = vshrl.u32 %v3058, 7
        %v3060 = vsub.s32 %v3057, %v3059
        %v3061 = vrot.slane %v2976, %v3060
        %v3064 = vunpack.c.l.s4 1983009808
        %v3065 = vunpack.c.0.s8 %v3064
        %v3066 = vlaneseq
        %v3067 = vshrl.u32 %v3066, 7
        %v3068 = vsub.s32 %v3065, %v3067
        %v3069 = vrot.slane %v2982, %v3068
        %v3070 = vcombine.low %v3061, %v3069
        %v3071 = vcombine.high %v3061, %v3069
        %v3073 = vunpack.c.l.s4 1934713408
        %v3074 = vunpack.c.0.s8 %v3073
        %v3075 = vlaneseq
        %v3076 = vshrl.u32 %v3075, 7
        %v3077 = vsub.s32 %v3074, %v3076
        %v3078 = vrot.slane %v3070, %v3077
        %v3080 = vunpack.c.l.s4 1934713408
        %v3081 = vunpack.c.0.s8 %v3080
        %v3082 = vlaneseq
        %v3083 = vshrl.u32 %v3082, 7
        %v3084 = vsub.s32 %v3081, %v3083
        %v3085 = vrot.slane %v3071, %v3084
        %v3086 = vcombine.high %v3078, 0
        %v3087 = vcombine.high %v3085, 0
        %v3090 = vunpack.c.l.s4 1983009808
        %v3091 = vunpack.c.0.s8 %v3090
        %v3092 = vlaneseq
        %v3093 = vshrl.u32 %v3092, 7
        %v3094 = vsub.s32 %v3091, %v3093
        %v3095 = vrot.slane %v2979, %v3094
        %v3098 = vunpack.c.l.s4 1983009808
        %v3099 = vunpack.c.0.s8 %v3098
        %v3100 = vlaneseq
        %v3101 = vshrl.u32 %v3100, 7
        %v3102 = vsub.s32 %v3099, %v3101
        %v3103 = vrot.slane %v2985, %v3102
        %v3104 = vcombine.low %v3095, %v3103
        %v3105 = vcombine.high %v3095, %v3103
        %v3107 = vunpack.c.l.s4 1934713408
        %v3108 = vunpack.c.0.s8 %v3107
        %v3109 = vlaneseq
        %v3110 = vshrl.u32 %v3109, 7
        %v3111 = vsub.s32 %v3108, %v3110
        %v3112 = vrot.slane %v3104, %v3111
        %v3114 = vunpack.c.l.s4 1934713408
        %v3115 = vunpack.c.0.s8 %v3114
        %v3116 = vlaneseq
        %v3117 = vshrl.u32 %v3116, 7
        %v3118 = vsub.s32 %v3115, %v3117
        %v3119 = vrot.slane %v3105, %v3118
        %v3120 = vcombine.high %v3112, 0
        %v3121 = vcombine.high %v3119, 0
        %v3123 = vunpack.c.l.b16 %v3044
        %v3124 = vpack.c.b16 %v3123, %v3123
        %3125 = vrot.lane.b32.xlu0 %v3124, 16
        %v3126 = vpop.permute.xlu0 %3125
        %v3128 = vunpack.c.l.b16 %v3018
        %v3129 = vpack.c.b16 %v3128, %v3128
        %3130 = vrot.lane.b32.xlu0 %v3129, 32
        %v3131 = vpop.permute.xlu0 %3130
        %v3133 = vunpack.c.l.b16 %v3052
        %v3134 = vpack.c.b16 %v3133, %v3133
        %3135 = vrot.lane.b32.xlu0 %v3134, 48
        %v3136 = vpop.permute.xlu0 %3135
        %v3138 = vunpack.c.l.b16 %v3017
        %v3139 = vpack.c.b16 %v3138, %v3138
        %3140 = vrot.lane.b32.xlu0 %v3139, 64
        %v3141 = vpop.permute.xlu0 %3140
        %v3143 = vunpack.c.l.b16 %v3051
        %v3144 = vpack.c.b16 %v3143, %v3143
        %3145 = vrot.lane.b32.xlu0 %v3144, 80
        %v3146 = vpop.permute.xlu0 %3145
        %v3148 = vunpack.c.l.b16 %v3019
        %v3149 = vpack.c.b16 %v3148, %v3148
        %3150 = vrot.lane.b32.xlu0 %v3149, 96
        %v3151 = vpop.permute.xlu0 %3150
        %v3153 = vunpack.c.l.b16 %v3053
        %v3154 = vpack.c.b16 %v3153, %v3153
        %3155 = vrot.lane.b32.xlu0 %v3154, 112
        %v3156 = vpop.permute.xlu0 %3155
        %v3158 = vunpack.c.l.b16 %v3112
        %v3159 = vpack.c.b16 %v3158, %v3158
        %3160 = vrot.lane.b32.xlu0 %v3159, 16
        %v3161 = vpop.permute.xlu0 %3160
        %v3163 = vunpack.c.l.b16 %v3086
        %v3164 = vpack.c.b16 %v3163, %v3163
        %3165 = vrot.lane.b32.xlu0 %v3164, 32
        %v3166 = vpop.permute.xlu0 %3165
        %v3168 = vunpack.c.l.b16 %v3120
        %v3169 = vpack.c.b16 %v3168, %v3168
        %3170 = vrot.lane.b32.xlu0 %v3169, 48
        %v3171 = vpop.permute.xlu0 %3170
        %v3173 = vunpack.c.l.b16 %v3085
        %v3174 = vpack.c.b16 %v3173, %v3173
        %3175 = vrot.lane.b32.xlu0 %v3174, 64
        %v3176 = vpop.permute.xlu0 %3175
        %v3178 = vunpack.c.l.b16 %v3119
        %v3179 = vpack.c.b16 %v3178, %v3178
        %3180 = vrot.lane.b32.xlu0 %v3179, 80
        %v3181 = vpop.permute.xlu0 %3180
        %v3183 = vunpack.c.l.b16 %v3087
        %v3184 = vpack.c.b16 %v3183, %v3183
        %3185 = vrot.lane.b32.xlu0 %v3184, 96
        %v3186 = vpop.permute.xlu0 %3185
        %v3188 = vunpack.c.l.b16 %v3121
        %v3189 = vpack.c.b16 %v3188, %v3188
        %3190 = vrot.lane.b32.xlu0 %v3189, 112
        %v3191 = vpop.permute.xlu0 %3190
        %v3194 = vsel %vm470, %v3010, %v3126
        %v3196 = vsel %vm474, %v3194, %v3131
        %v3198 = vsel %vm477, %v3196, %v3136
        %v3200 = vsel %vm480, %v3198, %v3141
        %v3202 = vsel %vm483, %v3200, %v3146
        %v3204 = vsel %vm486, %v3202, %v3151
        %v3206 = vsel %vm489, %v3204, %v3156
        %v3209 = vsel %vm470, %v3078, %v3161
        %v3211 = vsel %vm474, %v3209, %v3166
        %v3213 = vsel %vm477, %v3211, %v3171
        %v3215 = vsel %vm480, %v3213, %v3176
        %v3217 = vsel %vm483, %v3215, %v3181
        %v3219 = vsel %vm486, %v3217, %v3186
        %v3221 = vsel %vm489, %v3219, %v3191
        %s3222 = scalar_lea.vmem %s2, 32
        %v3223 = vld [vmem:[%s3222] sm:$0xf]
        %v3225 = vsel %vm794, %v3223, 0
        %v3227 = vsel %vm798, %v3206, 0
        %v3229 = vsel %vm798, %v3221, 0
        %3231 = vmatprep.subr.bf16.mxu0 %v3229
        %3232 = vmatpush1.bf16.msra.mxu0 %v3227
        %3233 = vmatprep.subr.bf16.mxu0 0
        %3234 = vmatpush1.bf16.msra.mxu0 0
        %3235 = vmatprep.subr.bf16.mxu0 0
        %3236 = vmatpush1.bf16.msra.mxu0 0
        %3237 = vmatprep.subr.bf16.mxu0 0
        %3238 = vmatpush1.bf16.msra.mxu0 0
        %3239 = vmatprep.subr.bf16.mxu0 0
        %3240 = vmatpush1.bf16.msra.mxu0 0
        %3241 = vmatprep.subr.bf16.mxu0 0
        %3242 = vmatpush1.bf16.msra.mxu0 0
        %3243 = vmatprep.subr.bf16.mxu0 0
        %3244 = vmatpush1.bf16.msra.mxu0 0
        %3245 = vmatprep.subr.bf16.mxu0 0
        %3246 = vmatpush1.bf16.msra.mxu0 0
        %3247 = vmatprep.subr.bf16.mxu0 0
        %3248 = vmatpush1.bf16.msra.mxu0 0
        %3249 = vmatprep.subr.bf16.mxu0 0
        %3250 = vmatpush1.bf16.msra.mxu0 0
        %3251 = vmatprep.subr.bf16.mxu0 0
        %3252 = vmatpush1.bf16.msra.mxu0 0
        %3253 = vmatprep.subr.bf16.mxu0 0
        %3254 = vmatpush1.bf16.msra.mxu0 0
        %3255 = vmatprep.subr.bf16.mxu0 0
        %3256 = vmatpush1.bf16.msra.mxu0 0
        %3257 = vmatprep.subr.bf16.mxu0 0
        %3258 = vmatpush1.bf16.msra.mxu0 0
        %3259 = vmatprep.subr.bf16.mxu0 0
        %3260 = vmatpush1.bf16.msra.mxu0 0
        %3261 = vmatprep.subr.bf16.mxu0 0
        %3262 = vmatpush1.bf16.msra.mxu0 0
        %3263 = vmatprep.mubr.bf16.mxu0 0
        %3264 = vmatmul.mubr.bf16.gmra.mrb[0].mxu0 %v3225
        %v3265 = vpop.f32.mrb[0].mxu0
        %v3266 = vadd.f32 0.0, %v3265
        %v3267 = vpop.f32.mrb[0].mxu0
        %v3268 = vadd.f32 0.0, %v3267
        %v3269 = vpop.f32.mrb[0].mxu0
        %v3270 = vpop.f32.mrb[0].mxu0
        %3271 = vdwg.mxu0
        %v3272 = vadd.f32 %v2944, %v3266
        %v3273 = vadd.f32 %v2945, %v3268
        %v3274 = vstv %s227
        %v3275 = vmul.f32 %v3272, %v3274
        %v3276 = vmul.f32 %v3273, %v3274
        %v3277 = vld [vmem:[%s3] sm:$0xff]
        %3279 = vset.pattern.permute.xlu0 0
        %3280 = vperm.xlu0 %3279, %v3277
        %v3281 = vpop.permute.xlu0 %3280
        %v3283 = vadd.f32 %v3275, %v3281
        %v3284 = vadd.f32 %v3276, %v3281
        %3285 = vst [vmem:[%s215] sm:$0xff] %v3283
        %3286 = vst [vmem:[%s215 + $0x8] sm:$0xff] %v3284
        %s3287 = sand.u32 %s132, 1
        %s3288 = scalar_lea.sflag [#allocation4], %s3287
        %s3289 = sand.u32 %s132, 1
        %s3290 = smul.addr %s3289, 16
        %s3291 = scalar_lea.vmem [#allocation3], %s3290
        // Predicated region
        $region37: #{tpu_custom_call.1} parent=35 // pred_check
          %p3292 = pneg %p142
        $region38: #{tpu_custom_call.1} parent=35 // pred_check_branch
          %3294 = sbr.rel (%p3292) target = $region40
        $region39: #{tpu_custom_call.1} parent=35 // pred_region
          %s3295 = smul.u32 2, %s24
          %s3297 = ssub.s32 256, 256
          %3298 = vsyncadd %s3288, %s3297
          %s3299 = smul.addr %s23, 2
          %s3300 = sadd.s32 %s3295, %s3299
          %s3301 = smul.addr %s3300, 128
          %s3302 = scalar_lea.hbm %s4, %s3301
          %s3304 = sshll.u32 %s3291, 4
          %s3305 = int_to_ptr.vmem [resolvable:$true] %s3304
          %3307 = dma.vmem_to_hbm [thread:$0]  %s3305, 256, %s3302, %s3288
        $region40: #{tpu_custom_call.1} parent=35 // pred_fallthru
          _
      $region36: #{tpu_custom_call.1} parent=5 // pred_fallthru
        _
      %p3308 = scmp.le.s32.totalorder 2, %s14
      // Predicated region
      $region41: #{tpu_custom_call.1} parent=5 // pred_check
        %p3309 = pneg %p3308
      $region42: #{tpu_custom_call.1} parent=5 // pred_check_branch
        %3311 = sbr.rel (%p3309) target = $region44
      $region43: #{tpu_custom_call.1} parent=5 // pred_region
        %s3312 = ssub.s32 %s14, 2
        // Predicated region
        $region45: #{tpu_custom_call.1} parent=43 // pred_check
          %p3313 = pneg %p148
        $region46: #{tpu_custom_call.1} parent=43 // pred_check_branch
          %3315 = sbr.rel (%p3313) target = $region48
        $region47: #{tpu_custom_call.1} parent=43 // pred_region
          %s3316 = sand.u32 %s133, 1
          %s3317 = scalar_lea.sflag [#allocation4], %s3316
          %s3318 = sand.u32 %s133, 1
          %s3319 = smul.addr %s3318, 16
          %s3320 = scalar_lea.vmem [#allocation3], %s3319
          %3321 = dma.done %s3317, 256
        $region48: #{tpu_custom_call.1} parent=43 // pred_fallthru
          _
      $region44: #{tpu_custom_call.1} parent=5 // pred_fallthru
        _
    $region6: #{tpu_custom_call.1} parent=1 // loop_footer
      %s18 = sadd.s32 1, %s14
    $region7: #{tpu_custom_call.1} parent=1 // loop_footer_branch
      %13 = sbr.rel target = $region3
    $region8: #{tpu_custom_call.1} parent=1 // loop_exit
      _
    %3322 = vsyncpa [#allocation4], 1
    %s3323 = scalar_lea.sflag [#allocation4], 1
    %3324 = vsyncpa %s3323, 1

</llo_original>
